<compile_context>
chip_gen: v7x
topology: tpu7x:2x2x1
jax: 0.10.0
libtpu: 0.0.40
codegen_flags: <defaults>
</compile_context>

<pallas_src>
from functools import partial

import jax
import jax.numpy as jnp
from jax import lax
from jax.experimental import pallas as pl
from jax.experimental.pallas import tpu as pltpu


VMEM_LIMIT_BYTES = 32 * 1024 * 1024  # tiles below are sized well under this


def _pick_tile(dim, target, base):
    """Largest tile <= target that is a multiple of `base` and divides `dim`;
    falls back to the full dim (single block) for small / awkward sizes."""
    if dim <= target:
        return dim
    t = (target // base) * base
    while t >= base:
        if dim % t == 0:
            return t
        t -= base
    return dim


# ----------------------------------------------------------------------------
# Projection kernel: x @ W + b, output written directly in [B, H, N, d] layout
# (head split fused into the output BlockSpec -> no HBM transpose pass).
# ----------------------------------------------------------------------------
def _proj_split_heads_kernel(x_ref, w_ref, b_ref, o_ref, acc_ref, *,
                             heads, dim_head):
    # x: [1, tm, tk]   w: [tk, inner]   b: [1, inner]
    # o: [1, H, tm, d] acc: [tm, inner] (f32)
    kk = pl.program_id(2)

    @pl.when(kk == 0)
    def _init():
        acc_ref[...] = jnp.zeros_like(acc_ref)

    acc_ref[...] += jnp.dot(x_ref[0], w_ref[...],
                            preferred_element_type=jnp.float32)

    @pl.when(kk == pl.num_programs(2) - 1)
    def _finalize():
        res = acc_ref[...] + b_ref[...].astype(jnp.float32)   # [tm, inner]
        for h in range(heads):                                 # static unroll
            o_ref[0, h] = res[:, h * dim_head:(h + 1) * dim_head].astype(
                o_ref.dtype)


def proj_split_heads(x, w, b, heads, *, tm_target=256, tk_target=512):
    """x:[B,N,K] @ w:[K, H*d] + b -> [B, H, N, d]."""
    B, N, K = x.shape
    inner = w.shape[1]
    d = inner // heads
    tm = _pick_tile(N, tm_target, 8)
    tk = _pick_tile(K, tk_target, 128)
    grid = (B, N // tm, K // tk)
    return pl.pallas_call(
        partial(_proj_split_heads_kernel, heads=heads, dim_head=d),
        out_shape=jax.ShapeDtypeStruct((B, heads, N, d), x.dtype),
        grid=grid,
        in_specs=[
            pl.BlockSpec((1, tm, tk), lambda bb, ii, kk: (bb, ii, kk)),
            pl.BlockSpec((tk, inner), lambda bb, ii, kk: (kk, 0)),
            pl.BlockSpec((1, inner), lambda bb, ii, kk: (0, 0)),
        ],
        out_specs=pl.BlockSpec((1, heads, tm, d),
                               lambda bb, ii, kk: (bb, 0, ii, 0)),
        scratch_shapes=[pltpu.VMEM((tm, inner), jnp.float32)],
        compiler_params=pltpu.CompilerParams(
            dimension_semantics=("parallel", "parallel", "arbitrary"),
            vmem_limit_bytes=VMEM_LIMIT_BYTES),
    )(x, w, b.reshape(1, inner))


# ----------------------------------------------------------------------------
# Output projection kernel: reads [B, H, N, d] directly (head merge done by an
# in-VMEM concat, no HBM transpose) and computes x_merged @ Wo + bo.
# ----------------------------------------------------------------------------
def _proj_merge_heads_kernel(x_ref, w_ref, b_ref, o_ref, *, heads):
    # x: [1, H, tm, d]   w: [inner, tn]   b: [1, tn]   o: [1, tm, tn]
    xm = jnp.concatenate([x_ref[0, h] for h in range(heads)], axis=1)
    acc = jnp.dot(xm, w_ref[...], preferred_element_type=jnp.float32)
    o_ref[0] = (acc + b_ref[...].astype(jnp.float32)).astype(o_ref.dtype)


def proj_merge_heads(x, w, b, *, tm_target=256, tn_target=512):
    """x:[B,H,N,d] (merged as 'b n (h d)') @ w:[H*d, Dout] + b -> [B,N,Dout]."""
    B, H, N, d = x.shape
    inner, Dout = w.shape
    assert inner == H * d
    tm = _pick_tile(N, tm_target, 8)
    tn = _pick_tile(Dout, tn_target, 128)
    grid = (B, N // tm, Dout // tn)
    return pl.pallas_call(
        partial(_proj_merge_heads_kernel, heads=H),
        out_shape=jax.ShapeDtypeStruct((B, N, Dout), x.dtype),
        grid=grid,
        in_specs=[
            pl.BlockSpec((1, H, tm, d), lambda bb, ii, jj: (bb, 0, ii, 0)),
            pl.BlockSpec((inner, tn), lambda bb, ii, jj: (0, jj)),
            pl.BlockSpec((1, tn), lambda bb, ii, jj: (0, jj)),
        ],
        out_specs=pl.BlockSpec((1, tm, tn), lambda bb, ii, jj: (bb, ii, jj)),
        compiler_params=pltpu.CompilerParams(
            dimension_semantics=("parallel", "parallel", "parallel"),
            vmem_limit_bytes=VMEM_LIMIT_BYTES),
    )(x, w, b.reshape(1, Dout))


# ----------------------------------------------------------------------------
# Flash attention kernel: per-(batch, head) tiles, KV-tiled online softmax.
# ----------------------------------------------------------------------------
def _flash_attn_kernel(q_ref, k_ref, v_ref, o_ref, m_sc, l_sc, acc_sc, *,
                       scale):
    # q: [1,1,tq,d]  k/v: [1,1,tkv,d]  o: [1,1,tq,d]
    ki = pl.program_id(3)

    @pl.when(ki == 0)
    def _init():
        m_sc[...] = jnp.full_like(m_sc, -jnp.inf)
        l_sc[...] = jnp.zeros_like(l_sc)
        acc_sc[...] = jnp.zeros_like(acc_sc)

    q = q_ref[0, 0].astype(jnp.float32) * scale     # fold scale into q (O(tq*d))
    k = k_ref[0, 0].astype(jnp.float32)
    v = v_ref[0, 0]

    # contraction over d expressed directly -> no k.T materialization
    s = lax.dot_general(q, k, dimension_numbers=(((1,), (1,)), ((), ())),
                        preferred_element_type=jnp.float32)      # [tq, tkv]
    # TODO(synk): optional edge_mask (masked_fill with -inf) not wired in.

    m_prev = m_sc[...]
    m_new = jnp.maximum(m_prev, jnp.max(s, axis=-1, keepdims=True))
    alpha = jnp.exp(m_prev - m_new)
    p = jnp.exp(s - m_new)
    l_sc[...] = alpha * l_sc[...] + jnp.sum(p, axis=-1, keepdims=True)
    acc_sc[...] = alpha * acc_sc[...] + jnp.dot(
        p.astype(v.dtype), v, preferred_element_type=jnp.float32)
    m_sc[...] = m_new

    @pl.when(ki == pl.num_programs(3) - 1)
    def _finalize():
        inv_l = pl.reciprocal(l_sc[...], approx=True)            # EUP slot
        o_ref[0, 0] = (acc_sc[...] * inv_l).astype(o_ref.dtype)


def flash_attention(q, k, v, *, scale, tq_target=256, tkv_target=512):
    B, H, N, d = q.shape
    tq = _pick_tile(N, tq_target, 8)
    tkv = _pick_tile(N, tkv_target, 128)
    grid = (B, H, N // tq, N // tkv)
    q_spec = pl.BlockSpec((1, 1, tq, d), lambda bb, hh, qi, ki: (bb, hh, qi, 0))
    kv_spec = pl.BlockSpec((1, 1, tkv, d), lambda bb, hh, qi, ki: (bb, hh, ki, 0))
    return pl.pallas_call(
        partial(_flash_attn_kernel, scale=scale),
        out_shape=jax.ShapeDtypeStruct((B, H, N, d), q.dtype),
        grid=grid,
        in_specs=[q_spec, kv_spec, kv_spec],
        out_specs=pl.BlockSpec((1, 1, tq, d),
                               lambda bb, hh, qi, ki: (bb, hh, qi, 0)),
        scratch_shapes=[pltpu.VMEM((tq, 1), jnp.float32),
                        pltpu.VMEM((tq, 1), jnp.float32),
                        pltpu.VMEM((tq, d), jnp.float32)],
        compiler_params=pltpu.CompilerParams(
            dimension_semantics=("parallel", "parallel", "parallel",
                                 "arbitrary"),
            vmem_limit_bytes=VMEM_LIMIT_BYTES),
    )(q, k, v)


# ----------------------------------------------------------------------------
# Module wrapper
# ----------------------------------------------------------------------------
def init_attention_params(key, dim, dim_head=64, heads=8, dtype=jnp.float32):
    inner = dim_head * heads
    ks = jax.random.split(key, 6)
    s = 0.02
    return {
        "wq": (s * jax.random.normal(ks[0], (dim, inner))).astype(dtype),
        "bq": (s * jax.random.normal(ks[1], (inner,))).astype(dtype),
        "wkv": (s * jax.random.normal(ks[2], (dim, 2 * inner))).astype(dtype),
        "bkv": (s * jax.random.normal(ks[3], (2 * inner,))).astype(dtype),
        "wo": (s * jax.random.normal(ks[4], (inner, dim))).astype(dtype),
        "bo": (s * jax.random.normal(ks[5], (dim,))).astype(dtype),
    }


def attention_forward(nodes, params, heads):
    B, N, dim = nodes.shape
    inner = params["wq"].shape[1]
    d = inner // heads
    scale = float(d) ** -0.5

    # kv weight split at the (tiny) weight level; activations never sliced.
    wkv, bkv = params["wkv"], params["bkv"]
    q = proj_split_heads(nodes, params["wq"], params["bq"], heads)   # [B,H,N,d]
    k = proj_split_heads(nodes, wkv[:, :inner], bkv[:inner], heads)  # [B,H,N,d]
    v = proj_split_heads(nodes, wkv[:, inner:], bkv[inner:], heads)  # [B,H,N,d]

    out = flash_attention(q, k, v, scale=scale)                       # [B,H,N,d]

    # head merge folded into the output-projection kernel's input BlockSpec.
    return proj_merge_heads(out, params["wo"], params["bo"])          # [B,N,dim]


# Pure-JAX reference (mirrors the PyTorch forward) for validation.
def attention_reference(nodes, params, heads):
    B, N, dim = nodes.shape
    q = nodes @ params["wq"] + params["bq"]
    kv = nodes @ params["wkv"] + params["bkv"]
    inner = q.shape[-1]
    d = inner // heads
    k, v = kv[..., :inner], kv[..., inner:]

    def split_heads(t):
        return (t.reshape(B, N, heads, d)
                 .transpose(0, 2, 1, 3)
                 .reshape(B * heads, N, d))

    qh, kh, vh = map(split_heads, (q, k, v))
    sim = jnp.einsum("bid,bjd->bij", qh, kh) * (float(d) ** -0.5)
    attn = jax.nn.softmax(sim, axis=-1)
    out = jnp.einsum("bij,bjd->bid", attn, vh)
    out = (out.reshape(B, heads, N, d)
              .transpose(0, 2, 1, 3)
              .reshape(B, N, inner))
    return out @ params["wo"] + params["bo"]


if __name__ == "__main__":
    B, N, DIM = 2, 8, 32
    HEADS, DIM_HEAD = 4, 16

    key = jax.random.PRNGKey(0)
    k_params, k_x = jax.random.split(key)
    params = init_attention_params(k_params, DIM, dim_head=DIM_HEAD,
                                   heads=HEADS)
    nodes = jax.random.normal(k_x, (B, N, DIM), dtype=jnp.float32)

    fwd = jax.jit(lambda n, p: attention_forward(n, p, HEADS))
    y = fwd(nodes, params)
    y = jax.block_until_ready(y)

    y_ref = attention_reference(nodes, params, HEADS)
    assert y.shape == (B, N, DIM)
    # approx reciprocal in the softmax epilogue introduces ~1e-4-level error.
    assert jnp.allclose(y, y_ref, atol=2e-3, rtol=2e-3), "mismatch vs reference"

    print("KERNEL_OK")
</pallas_src>

<mosaic_0001>
module attributes {stable_mosaic.version = 11 : i64} {
  func.func @_proj_split_heads_kernel(%arg0: i32, %arg1: i32, %arg2: i32, %arg3: memref<1x8x32xf32, #tpu.memory_space<vmem>>, %arg4: memref<32x64xf32, #tpu.memory_space<vmem>>, %arg5: memref<1x64xf32, #tpu.memory_space<vmem>>, %arg6: memref<1x4x8x16xf32, #tpu.memory_space<vmem>>, %arg7: memref<8x64xf32, #tpu.memory_space<vmem>>) attributes {dimension_semantics = [#tpu.dimension_semantics<parallel>, #tpu.dimension_semantics<parallel>, #tpu.dimension_semantics<arbitrary>], iteration_bounds = array<i64: 2, 1, 1>, scalar_prefetch = 0 : i64, scratch_operands = 1 : i64, tpu.core_type = #tpu.core_type<tc>, window_params = [{transform_indices = @transform_0, window_bounds = array<i64: 1, 8, 32>}, {transform_indices = @transform_1, window_bounds = array<i64: 32, 64>}, {pipeline_mode = #tpu.pipeline_mode<synchronous>, transform_indices = @transform_2, window_bounds = array<i64: 1, 64>}, {transform_indices = @transform_3, window_bounds = array<i64: 1, 4, 8, 16>}]} {
    %c0_i32 = arith.constant 0 : i32
    %0 = arith.cmpi eq, %arg2, %c0_i32 : i32
    %1 = arith.extui %0 : i1 to i32
    %c0_i32_0 = arith.constant 0 : i32
    %2 = arith.cmpi ne, %1, %c0_i32_0 : i32
    scf.if %2 {
      %cst_11 = arith.constant 0.000000e+00 : f32
      %13 = vector.broadcast %cst_11 : f32 to vector<8x64xf32>
      %c0_12 = arith.constant 0 : index
      %c0_13 = arith.constant 0 : index
      %14 = vector.load %arg7[%c0_12, %c0_13] : memref<8x64xf32, #tpu.memory_space<vmem>>, vector<8x64xf32>
      tpu.vector_store %arg7[%c0_12, %c0_13], %13 {strides = array<i32>} : memref<8x64xf32, #tpu.memory_space<vmem>>, vector<8x64xf32>,
    } else {
    }
    %c0 = arith.constant 0 : index
    %c0_1 = arith.constant 0 : index
    %3 = vector.load %arg7[%c0, %c0_1] : memref<8x64xf32, #tpu.memory_space<vmem>>, vector<8x64xf32>
    %c0_2 = arith.constant 0 : index
    %c0_3 = arith.constant 0 : index
    %c0_4 = arith.constant 0 : index
    %4 = vector.load %arg3[%c0_2, %c0_3, %c0_4] : memref<1x8x32xf32, #tpu.memory_space<vmem>>, vector<1x8x32xf32>
    %5 = vector.shape_cast %4 : vector<1x8x32xf32> to vector<8x32xf32>
    %c0_5 = arith.constant 0 : index
    %c0_6 = arith.constant 0 : index
    %6 = vector.load %arg4[%c0_5, %c0_6] : memref<32x64xf32, #tpu.memory_space<vmem>>, vector<32x64xf32>
    %cst = arith.constant dense<0.000000e+00> : vector<8x64xf32>
    %7 = tpu.matmul %5, %6, %cst {dimension_numbers = #tpu.dot_dimension_numbers<[1], [0], [0], [1], [0, 0, 1, 1], [], []>} : vector<8x32xf32>, vector<32x64xf32>, vector<8x64xf32> -> vector<8x64xf32>
    %8 = arith.addf %3, %7 : vector<8x64xf32>
    %c0_7 = arith.constant 0 : index
    %c0_8 = arith.constant 0 : index
    %9 = vector.load %arg7[%c0_7, %c0_8] : memref<8x64xf32, #tpu.memory_space<vmem>>, vector<8x64xf32>
    tpu.vector_store %arg7[%c0_7, %c0_8], %8 {strides = array<i32>} : memref<8x64xf32, #tpu.memory_space<vmem>>, vector<8x64xf32>,
    %c0_i32_9 = arith.constant 0 : i32
    %10 = arith.cmpi eq, %arg2, %c0_i32_9 : i32
    %11 = arith.extui %10 : i1 to i32
    %c0_i32_10 = arith.constant 0 : i32
    %12 = arith.cmpi ne, %11, %c0_i32_10 : i32
    scf.if %12 {
      %c0_11 = arith.constant 0 : index
      %c0_12 = arith.constant 0 : index
      %13 = vector.load %arg7[%c0_11, %c0_12] : memref<8x64xf32, #tpu.memory_space<vmem>>, vector<8x64xf32>
      %c0_13 = arith.constant 0 : index
      %c0_14 = arith.constant 0 : index
      %14 = vector.load %arg5[%c0_13, %c0_14] : memref<1x64xf32, #tpu.memory_space<vmem>>, vector<1x64xf32>
      %15 = vector.broadcast %14 : vector<1x64xf32> to vector<8x64xf32>
      %16 = arith.addf %13, %15 : vector<8x64xf32>
      %17 = vector.extract_strided_slice %16 {offsets = [0, 0], sizes = [8, 16], strides = [1, 1]} : vector<8x64xf32> to vector<8x16xf32>
      %c0_15 = arith.constant 0 : index
      %c0_16 = arith.constant 0 : index
      %c0_17 = arith.constant 0 : index
      %c0_18 = arith.constant 0 : index
      %18 = vector.load %arg6[%c0_15, %c0_16, %c0_17, %c0_18] : memref<1x4x8x16xf32, #tpu.memory_space<vmem>>, vector<1x1x8x16xf32>
      %19 = vector.shape_cast %18 : vector<1x1x8x16xf32> to vector<8x16xf32>
      %20 = vector.shape_cast %17 : vector<8x16xf32> to vector<1x1x8x16xf32>
      tpu.vector_store %arg6[%c0_15, %c0_16, %c0_17, %c0_18], %20 {strides = array<i32>} : memref<1x4x8x16xf32, #tpu.memory_space<vmem>>, vector<1x1x8x16xf32>,
      %21 = vector.extract_strided_slice %16 {offsets = [0, 16], sizes = [8, 16], strides = [1, 1]} : vector<8x64xf32> to vector<8x16xf32>
      %c0_19 = arith.constant 0 : index
      %c1 = arith.constant 1 : index
      %c0_20 = arith.constant 0 : index
      %c0_21 = arith.constant 0 : index
      %22 = vector.load %arg6[%c0_19, %c1, %c0_20, %c0_21] : memref<1x4x8x16xf32, #tpu.memory_space<vmem>>, vector<1x1x8x16xf32>
      %23 = vector.shape_cast %22 : vector<1x1x8x16xf32> to vector<8x16xf32>
      %24 = vector.shape_cast %21 : vector<8x16xf32> to vector<1x1x8x16xf32>
      tpu.vector_store %arg6[%c0_19, %c1, %c0_20, %c0_21], %24 {strides = array<i32>} : memref<1x4x8x16xf32, #tpu.memory_space<vmem>>, vector<1x1x8x16xf32>,
      %25 = vector.extract_strided_slice %16 {offsets = [0, 32], sizes = [8, 16], strides = [1, 1]} : vector<8x64xf32> to vector<8x16xf32>
      %c0_22 = arith.constant 0 : index
      %c2 = arith.constant 2 : index
      %c0_23 = arith.constant 0 : index
      %c0_24 = arith.constant 0 : index
      %26 = vector.load %arg6[%c0_22, %c2, %c0_23, %c0_24] : memref<1x4x8x16xf32, #tpu.memory_space<vmem>>, vector<1x1x8x16xf32>
      %27 = vector.shape_cast %26 : vector<1x1x8x16xf32> to vector<8x16xf32>
      %28 = vector.shape_cast %25 : vector<8x16xf32> to vector<1x1x8x16xf32>
      tpu.vector_store %arg6[%c0_22, %c2, %c0_23, %c0_24], %28 {strides = array<i32>} : memref<1x4x8x16xf32, #tpu.memory_space<vmem>>, vector<1x1x8x16xf32>,
      %29 = vector.extract_strided_slice %16 {offsets = [0, 48], sizes = [8, 16], strides = [1, 1]} : vector<8x64xf32> to vector<8x16xf32>
      %c0_25 = arith.constant 0 : index
      %c3 = arith.constant 3 : index
      %c0_26 = arith.constant 0 : index
      %c0_27 = arith.constant 0 : index
      %30 = vector.load %arg6[%c0_25, %c3, %c0_26, %c0_27] : memref<1x4x8x16xf32, #tpu.memory_space<vmem>>, vector<1x1x8x16xf32>
      %31 = vector.shape_cast %30 : vector<1x1x8x16xf32> to vector<8x16xf32>
      %32 = vector.shape_cast %29 : vector<8x16xf32> to vector<1x1x8x16xf32>
      tpu.vector_store %arg6[%c0_25, %c3, %c0_26, %c0_27], %32 {strides = array<i32>} : memref<1x4x8x16xf32, #tpu.memory_space<vmem>>, vector<1x1x8x16xf32>,
    } else {
    }
    return
  }
  func.func @transform_0(%arg0: i32, %arg1: i32, %arg2: i32) -> (i32, i32, i32) {
    %c0_i32 = arith.constant 0 : i32
    return %arg0, %arg1, %arg2 : i32, i32, i32
  }
  func.func @transform_1(%arg0: i32, %arg1: i32, %arg2: i32) -> (i32, i32) {
    %c0_i32 = arith.constant 0 : i32
    %c0_i32_0 = arith.constant 0 : i32
    return %arg2, %c0_i32 : i32, i32
  }
  func.func @transform_2(%arg0: i32, %arg1: i32, %arg2: i32) -> (i32, i32) {
    %c0_i32 = arith.constant 0 : i32
    %c0_i32_0 = arith.constant 0 : i32
    %c0_i32_1 = arith.constant 0 : i32
    return %c0_i32, %c0_i32_0 : i32, i32
  }
  func.func @transform_3(%arg0: i32, %arg1: i32, %arg2: i32) -> (i32, i32, i32, i32) {
    %c0_i32 = arith.constant 0 : i32
    %c0_i32_0 = arith.constant 0 : i32
    %c0_i32_1 = arith.constant 0 : i32
    return %arg0, %c0_i32, %arg1, %c0_i32_0 : i32, i32, i32, i32
  }
}

module attributes {stable_mosaic.version = 11 : i64} {
  func.func @_flash_attn_kernel(%arg0: i32, %arg1: i32, %arg2: i32, %arg3: i32, %arg4: memref<1x1x8x16xf32, #tpu.memory_space<vmem>>, %arg5: memref<1x1x8x16xf32, #tpu.memory_space<vmem>>, %arg6: memref<1x1x8x16xf32, #tpu.memory_space<vmem>>, %arg7: memref<1x1x8x16xf32, #tpu.memory_space<vmem>>, %arg8: memref<8x1xf32, #tpu.memory_space<vmem>>, %arg9: memref<8x1xf32, #tpu.memory_space<vmem>>, %arg10: memref<8x16xf32, #tpu.memory_space<vmem>>) attributes {dimension_semantics = [#tpu.dimension_semantics<parallel>, #tpu.dimension_semantics<parallel>, #tpu.dimension_semantics<parallel>, #tpu.dimension_semantics<arbitrary>], iteration_bounds = array<i64: 2, 4, 1, 1>, scalar_prefetch = 0 : i64, scratch_operands = 3 : i64, tpu.core_type = #tpu.core_type<tc>, window_params = [{transform_indices = @transform_0, window_bounds = array<i64: 1, 1, 8, 16>}, {transform_indices = @transform_1, window_bounds = array<i64: 1, 1, 8, 16>}, {transform_indices = @transform_2, window_bounds = array<i64: 1, 1, 8, 16>}, {transform_indices = @transform_3, window_bounds = array<i64: 1, 1, 8, 16>}]} {
    %c0_i32 = arith.constant 0 : i32
    %0 = arith.cmpi eq, %arg3, %c0_i32 : i32
    %1 = arith.extui %0 : i1 to i32
    %c0_i32_0 = arith.constant 0 : i32
    %2 = arith.cmpi ne, %1, %c0_i32_0 : i32
    scf.if %2 {
      %cst_30 = arith.constant 0xFF800000 : f32
      %37 = vector.broadcast %cst_30 : f32 to vector<8x1xf32>
      %c0_31 = arith.constant 0 : index
      %c0_32 = arith.constant 0 : index
      %38 = vector.load %arg8[%c0_31, %c0_32] : memref<8x1xf32, #tpu.memory_space<vmem>>, vector<8x1xf32>
      tpu.vector_store %arg8[%c0_31, %c0_32], %37 {strides = array<i32>} : memref<8x1xf32, #tpu.memory_space<vmem>>, vector<8x1xf32>,
      %cst_33 = arith.constant 0.000000e+00 : f32
      %39 = vector.broadcast %cst_33 : f32 to vector<8x1xf32>
      %c0_34 = arith.constant 0 : index
      %c0_35 = arith.constant 0 : index
      %40 = vector.load %arg9[%c0_34, %c0_35] : memref<8x1xf32, #tpu.memory_space<vmem>>, vector<8x1xf32>
      tpu.vector_store %arg9[%c0_34, %c0_35], %39 {strides = array<i32>} : memref<8x1xf32, #tpu.memory_space<vmem>>, vector<8x1xf32>,
      %cst_36 = arith.constant 0.000000e+00 : f32
      %41 = vector.broadcast %cst_36 : f32 to vector<8x16xf32>
      %c0_37 = arith.constant 0 : index
      %c0_38 = arith.constant 0 : index
      %42 = vector.load %arg10[%c0_37, %c0_38] : memref<8x16xf32, #tpu.memory_space<vmem>>, vector<8x16xf32>
      tpu.vector_store %arg10[%c0_37, %c0_38], %41 {strides = array<i32>} : memref<8x16xf32, #tpu.memory_space<vmem>>, vector<8x16xf32>,
    } else {
    }
    %c0 = arith.constant 0 : index
    %c0_1 = arith.constant 0 : index
    %c0_2 = arith.constant 0 : index
    %c0_3 = arith.constant 0 : index
    %3 = vector.load %arg4[%c0, %c0_1, %c0_2, %c0_3] : memref<1x1x8x16xf32, #tpu.memory_space<vmem>>, vector<1x1x8x16xf32>
    %4 = vector.shape_cast %3 : vector<1x1x8x16xf32> to vector<8x16xf32>
    %cst = arith.constant 2.500000e-01 : f32
    %5 = vector.broadcast %cst : f32 to vector<8x16xf32>
    %6 = arith.mulf %4, %5 : vector<8x16xf32>
    %c0_4 = arith.constant 0 : index
    %c0_5 = arith.constant 0 : index
    %c0_6 = arith.constant 0 : index
    %c0_7 = arith.constant 0 : index
    %7 = vector.load %arg5[%c0_4, %c0_5, %c0_6, %c0_7] : memref<1x1x8x16xf32, #tpu.memory_space<vmem>>, vector<1x1x8x16xf32>
    %8 = vector.shape_cast %7 : vector<1x1x8x16xf32> to vector<8x16xf32>
    %c0_8 = arith.constant 0 : index
    %c0_9 = arith.constant 0 : index
    %c0_10 = arith.constant 0 : index
    %c0_11 = arith.constant 0 : index
    %9 = vector.load %arg6[%c0_8, %c0_9, %c0_10, %c0_11] : memref<1x1x8x16xf32, #tpu.memory_space<vmem>>, vector<1x1x8x16xf32>
    %10 = vector.shape_cast %9 : vector<1x1x8x16xf32> to vector<8x16xf32>
    %cst_12 = arith.constant dense<0.000000e+00> : vector<8x8xf32>
    %11 = tpu.matmul %6, %8, %cst_12 {dimension_numbers = #tpu.dot_dimension_numbers<[1], [1], [0], [0], [0, 0, 1, 0], [], []>} : vector<8x16xf32>, vector<8x16xf32>, vector<8x8xf32> -> vector<8x8xf32>
    %c0_13 = arith.constant 0 : index
    %c0_14 = arith.constant 0 : index
    %12 = vector.load %arg8[%c0_13, %c0_14] : memref<8x1xf32, #tpu.memory_space<vmem>>, vector<8x1xf32>
    %cst_15 = arith.constant dense<0xFF800000> : vector<8xf32>
    %13 = vector.multi_reduction <maximumf>, %11, %cst_15 [1] : vector<8x8xf32> to vector<8xf32>
    %14 = vector.shape_cast %13 : vector<8xf32> to vector<8x1xf32>
    %15 = arith.maximumf %12, %14 : vector<8x1xf32>
    %16 = arith.subf %12, %15 : vector<8x1xf32>
    %17 = math.exp %16 : vector<8x1xf32>
    %18 = vector.broadcast %15 : vector<8x1xf32> to vector<8x8xf32>
    %19 = arith.subf %11, %18 : vector<8x8xf32>
    %20 = math.exp %19 : vector<8x8xf32>
    %c0_16 = arith.constant 0 : index
    %c0_17 = arith.constant 0 : index
    %21 = vector.load %arg9[%c0_16, %c0_17] : memref<8x1xf32, #tpu.memory_space<vmem>>, vector<8x1xf32>
    %22 = arith.mulf %17, %21 : vector<8x1xf32>
    %cst_18 = arith.constant dense<0.000000e+00> : vector<8xf32>
    %23 = vector.multi_reduction <add>, %20, %cst_18 [1] : vector<8x8xf32> to vector<8xf32>
    %24 = vector.shape_cast %23 : vector<8xf32> to vector<8x1xf32>
    %25 = arith.addf %22, %24 : vector<8x1xf32>
    %c0_19 = arith.constant 0 : index
    %c0_20 = arith.constant 0 : index
    %26 = vector.load %arg9[%c0_19, %c0_20] : memref<8x1xf32, #tpu.memory_space<vmem>>, vector<8x1xf32>
    tpu.vector_store %arg9[%c0_19, %c0_20], %25 {strides = array<i32>} : memref<8x1xf32, #tpu.memory_space<vmem>>, vector<8x1xf32>,
    %c0_21 = arith.constant 0 : index
    %c0_22 = arith.constant 0 : index
    %27 = vector.load %arg10[%c0_21, %c0_22] : memref<8x16xf32, #tpu.memory_space<vmem>>, vector<8x16xf32>
    %28 = vector.broadcast %17 : vector<8x1xf32> to vector<8x16xf32>
    %29 = arith.mulf %28, %27 : vector<8x16xf32>
    %cst_23 = arith.constant dense<0.000000e+00> : vector<8x16xf32>
    %30 = tpu.matmul %20, %10, %cst_23 {dimension_numbers = #tpu.dot_dimension_numbers<[1], [0], [0], [1], [0, 0, 1, 1], [], []>} : vector<8x8xf32>, vector<8x16xf32>, vector<8x16xf32> -> vector<8x16xf32>
    %31 = arith.addf %29, %30 : vector<8x16xf32>
    %c0_24 = arith.constant 0 : index
    %c0_25 = arith.constant 0 : index
    %32 = vector.load %arg10[%c0_24, %c0_25] : memref<8x16xf32, #tpu.memory_space<vmem>>, vector<8x16xf32>
    tpu.vector_store %arg10[%c0_24, %c0_25], %31 {strides = array<i32>} : memref<8x16xf32, #tpu.memory_space<vmem>>, vector<8x16xf32>,
    %c0_26 = arith.constant 0 : index
    %c0_27 = arith.constant 0 : index
    %33 = vector.load %arg8[%c0_26, %c0_27] : memref<8x1xf32, #tpu.memory_space<vmem>>, vector<8x1xf32>
    tpu.vector_store %arg8[%c0_26, %c0_27], %15 {strides = array<i32>} : memref<8x1xf32, #tpu.memory_space<vmem>>, vector<8x1xf32>,
    %c0_i32_28 = arith.constant 0 : i32
    %34 = arith.cmpi eq, %arg3, %c0_i32_28 : i32
    %35 = arith.extui %34 : i1 to i32
    %c0_i32_29 = arith.constant 0 : i32
    %36 = arith.cmpi ne, %35, %c0_i32_29 : i32
    scf.if %36 {
      %c0_30 = arith.constant 0 : index
      %c0_31 = arith.constant 0 : index
      %37 = vector.load %arg9[%c0_30, %c0_31] : memref<8x1xf32, #tpu.memory_space<vmem>>, vector<8x1xf32>
      %38 = tpu.reciprocal %37 {approx = true} : vector<8x1xf32> -> vector<8x1xf32>
      %c0_32 = arith.constant 0 : index
      %c0_33 = arith.constant 0 : index
      %39 = vector.load %arg10[%c0_32, %c0_33] : memref<8x16xf32, #tpu.memory_space<vmem>>, vector<8x16xf32>
      %40 = vector.broadcast %38 : vector<8x1xf32> to vector<8x16xf32>
      %41 = arith.mulf %39, %40 : vector<8x16xf32>
      %c0_34 = arith.constant 0 : index
      %c0_35 = arith.constant 0 : index
      %c0_36 = arith.constant 0 : index
      %c0_37 = arith.constant 0 : index
      %42 = vector.load %arg7[%c0_34, %c0_35, %c0_36, %c0_37] : memref<1x1x8x16xf32, #tpu.memory_space<vmem>>, vector<1x1x8x16xf32>
      %43 = vector.shape_cast %42 : vector<1x1x8x16xf32> to vector<8x16xf32>
      %44 = vector.shape_cast %41 : vector<8x16xf32> to vector<1x1x8x16xf32>
      tpu.vector_store %arg7[%c0_34, %c0_35, %c0_36, %c0_37], %44 {strides = array<i32>} : memref<1x1x8x16xf32, #tpu.memory_space<vmem>>, vector<1x1x8x16xf32>,
    } else {
    }
    return
  }
  func.func @transform_0(%arg0: i32, %arg1: i32, %arg2: i32, %arg3: i32) -> (i32, i32, i32, i32) {
    %c0_i32 = arith.constant 0 : i32
    %c0_i32_0 = arith.constant 0 : i32
    return %arg0, %arg1, %arg2, %c0_i32 : i32, i32, i32, i32
  }
  func.func @transform_1(%arg0: i32, %arg1: i32, %arg2: i32, %arg3: i32) -> (i32, i32, i32, i32) {
    %c0_i32 = arith.constant 0 : i32
    %c0_i32_0 = arith.constant 0 : i32
    return %arg0, %arg1, %arg3, %c0_i32 : i32, i32, i32, i32
  }
  func.func @transform_2(%arg0: i32, %arg1: i32, %arg2: i32, %arg3: i32) -> (i32, i32, i32, i32) {
    %c0_i32 = arith.constant 0 : i32
    %c0_i32_0 = arith.constant 0 : i32
    return %arg0, %arg1, %arg3, %c0_i32 : i32, i32, i32, i32
  }
  func.func @transform_3(%arg0: i32, %arg1: i32, %arg2: i32, %arg3: i32) -> (i32, i32, i32, i32) {
    %c0_i32 = arith.constant 0 : i32
    %c0_i32_0 = arith.constant 0 : i32
    return %arg0, %arg1, %arg2, %c0_i32 : i32, i32, i32, i32
  }
}

module attributes {stable_mosaic.version = 11 : i64} {
  func.func @_proj_merge_heads_kernel(%arg0: i32, %arg1: i32, %arg2: i32, %arg3: memref<1x4x8x16xf32, #tpu.memory_space<vmem>>, %arg4: memref<64x32xf32, #tpu.memory_space<vmem>>, %arg5: memref<1x32xf32, #tpu.memory_space<vmem>>, %arg6: memref<1x8x32xf32, #tpu.memory_space<vmem>>) attributes {dimension_semantics = [#tpu.dimension_semantics<parallel>, #tpu.dimension_semantics<parallel>, #tpu.dimension_semantics<parallel>], iteration_bounds = array<i64: 2, 1, 1>, scalar_prefetch = 0 : i64, scratch_operands = 0 : i64, tpu.core_type = #tpu.core_type<tc>, window_params = [{transform_indices = @transform_0, window_bounds = array<i64: 1, 4, 8, 16>}, {transform_indices = @transform_1, window_bounds = array<i64: 64, 32>}, {transform_indices = @transform_2, window_bounds = array<i64: 1, 32>}, {transform_indices = @transform_3, window_bounds = array<i64: 1, 8, 32>}]} {
    %c0 = arith.constant 0 : index
    %c0_0 = arith.constant 0 : index
    %c0_1 = arith.constant 0 : index
    %c0_2 = arith.constant 0 : index
    %0 = vector.load %arg3[%c0, %c0_0, %c0_1, %c0_2] : memref<1x4x8x16xf32, #tpu.memory_space<vmem>>, vector<1x1x8x16xf32>
    %1 = vector.shape_cast %0 : vector<1x1x8x16xf32> to vector<8x16xf32>
    %c0_3 = arith.constant 0 : index
    %c1 = arith.constant 1 : index
    %c0_4 = arith.constant 0 : index
    %c0_5 = arith.constant 0 : index
    %2 = vector.load %arg3[%c0_3, %c1, %c0_4, %c0_5] : memref<1x4x8x16xf32, #tpu.memory_space<vmem>>, vector<1x1x8x16xf32>
    %3 = vector.shape_cast %2 : vector<1x1x8x16xf32> to vector<8x16xf32>
    %c0_6 = arith.constant 0 : index
    %c2 = arith.constant 2 : index
    %c0_7 = arith.constant 0 : index
    %c0_8 = arith.constant 0 : index
    %4 = vector.load %arg3[%c0_6, %c2, %c0_7, %c0_8] : memref<1x4x8x16xf32, #tpu.memory_space<vmem>>, vector<1x1x8x16xf32>
    %5 = vector.shape_cast %4 : vector<1x1x8x16xf32> to vector<8x16xf32>
    %c0_9 = arith.constant 0 : index
    %c3 = arith.constant 3 : index
    %c0_10 = arith.constant 0 : index
    %c0_11 = arith.constant 0 : index
    %6 = vector.load %arg3[%c0_9, %c3, %c0_10, %c0_11] : memref<1x4x8x16xf32, #tpu.memory_space<vmem>>, vector<1x1x8x16xf32>
    %7 = vector.shape_cast %6 : vector<1x1x8x16xf32> to vector<8x16xf32>
    %8 = tpu.concatenate %1, %3, %5, %7 in 1 : vector<8x16xf32>, vector<8x16xf32>, vector<8x16xf32>, vector<8x16xf32> -> vector<8x64xf32>
    %c0_12 = arith.constant 0 : index
    %c0_13 = arith.constant 0 : index
    %9 = vector.load %arg4[%c0_12, %c0_13] : memref<64x32xf32, #tpu.memory_space<vmem>>, vector<64x32xf32>
    %cst = arith.constant dense<0.000000e+00> : vector<8x32xf32>
    %10 = tpu.matmul %8, %9, %cst {dimension_numbers = #tpu.dot_dimension_numbers<[1], [0], [0], [1], [0, 0, 1, 1], [], []>} : vector<8x64xf32>, vector<64x32xf32>, vector<8x32xf32> -> vector<8x32xf32>
    %c0_14 = arith.constant 0 : index
    %c0_15 = arith.constant 0 : index
    %11 = vector.load %arg5[%c0_14, %c0_15] : memref<1x32xf32, #tpu.memory_space<vmem>>, vector<1x32xf32>
    %12 = vector.broadcast %11 : vector<1x32xf32> to vector<8x32xf32>
    %13 = arith.addf %10, %12 : vector<8x32xf32>
    %c0_16 = arith.constant 0 : index
    %c0_17 = arith.constant 0 : index
    %c0_18 = arith.constant 0 : index
    %14 = vector.load %arg6[%c0_16, %c0_17, %c0_18] : memref<1x8x32xf32, #tpu.memory_space<vmem>>, vector<1x8x32xf32>
    %15 = vector.shape_cast %14 : vector<1x8x32xf32> to vector<8x32xf32>
    %16 = vector.shape_cast %13 : vector<8x32xf32> to vector<1x8x32xf32>
    tpu.vector_store %arg6[%c0_16, %c0_17, %c0_18], %16 {strides = array<i32>} : memref<1x8x32xf32, #tpu.memory_space<vmem>>, vector<1x8x32xf32>,
    return
  }
  func.func @transform_0(%arg0: i32, %arg1: i32, %arg2: i32) -> (i32, i32, i32, i32) {
    %c0_i32 = arith.constant 0 : i32
    %c0_i32_0 = arith.constant 0 : i32
    %c0_i32_1 = arith.constant 0 : i32
    return %arg0, %c0_i32, %arg1, %c0_i32_0 : i32, i32, i32, i32
  }
  func.func @transform_1(%arg0: i32, %arg1: i32, %arg2: i32) -> (i32, i32) {
    %c0_i32 = arith.constant 0 : i32
    %c0_i32_0 = arith.constant 0 : i32
    return %c0_i32, %arg2 : i32, i32
  }
  func.func @transform_2(%arg0: i32, %arg1: i32, %arg2: i32) -> (i32, i32) {
    %c0_i32 = arith.constant 0 : i32
    %c0_i32_0 = arith.constant 0 : i32
    return %c0_i32, %arg2 : i32, i32
  }
  func.func @transform_3(%arg0: i32, %arg1: i32, %arg2: i32) -> (i32, i32, i32) {
    %c0_i32 = arith.constant 0 : i32
    return %arg0, %arg1, %arg2 : i32, i32, i32
  }
}

</mosaic_0001>

<llo_original>
// kernel: _lambda_.6
$region0: #{_lambda_.6}
  #allocation0 [shape = 'u32[]', space=smem, size = 0x4, offset = 0x4, fixed_abs, tag = 'smem constant byte address 0x4 - core index']
  #allocation1 [shape = 'u32[144,128]{1,0:T(1,128)}', space=vmem, size = 0x12000, scoped, tag = 'internal scratch']
  #allocation2 [shape = 'f32[8,64]{1,0:T(8,128)}', space=vmem, size = 0x1000, scoped, tag = 'scratch operand']
  %s0 = inlined_call_operand.vmem [shape: f32[2,8,32], index: 0, kind: input, shape index: {}]
  %s1 = inlined_call_operand.vmem [shape: f32[32,64], index: 1, kind: input, shape index: {}]
  %s2 = inlined_call_operand.vmem [shape: f32[1,64], index: 2, kind: input, shape index: {}]
  %s3 = inlined_call_operand.vmem [shape: f32[2,4,8,16], index: 3, kind: output, shape index: {}]
  %s4 = sld [smem:[#allocation0]]
  $region53: #{_lambda_.6} parent=0
    _
  %s6 = ssub.s32 1, %s4
  %s7 = scalar_select 0, %s6, %s4
  loop: start=0, step=1, limit=4
  $region2: #{_lambda_.6} parent=0 // loop_pre_header
    _
  $region3: #{_lambda_.6} parent=0 // loop_header
    %s9 = sphi 0, %s13
    %p10 = scmp.ge.s32.totalorder %s9, 4
    %s16 = sphi 0, %s35
    %s17 = sphi 0, %s31
    %s18 = sphi 0, %s27
    %s19 = sphi 0, %s16
    %s20 = sphi 0, %s17
    %s21 = sphi 0, %s18
    %s22 = sphi 0, %s19
    %s23 = sphi 0, %s20
    %s24 = sphi 0, %s21
    %s42 = sphi 0, %s44
    %s45 = sphi 0, %s42
    %s46 = sphi 0, %s45
    %s62 = sphi 0, %s46
    %s68 = sphi 0, %s70
    %s71 = sphi 0, %s68
    %s72 = sphi 0, %s71
    %s88 = sphi 0, %s72
    %s92 = sphi 0, %s92
    %s94 = sphi 0, %s92
    %s95 = sphi 0, %s94
    %s109 = sphi 0, %s95
    %s117 = sphi 0, %s119
    %s120 = sphi 0, %s117
    %s121 = sphi 0, %s120
    %s137 = sphi 0, %s121
  $region4: #{_lambda_.6} parent=0 // loop_header_branch
    %12 = sbr.rel (%p10) target = $region8
  $region5: #{_lambda_.6} parent=0 // loop_body
    %s14 = ssub.s32 %s9, 1
    %s15 = ssub.s32 %s9, 2
    %s25 = sadd.s32 1, %s18
    %p26 = scmp.ge.s32.totalorder %s25, 1
    %s27 = scalar_select %p26, 0, %s25
    %s28 = sadd.s32 1, %s17
    %s29 = scalar_select %p26, %s28, %s17
    %p30 = scmp.ge.s32.totalorder %s29, 1
    %s31 = scalar_select %p30, 0, %s29
    %s32 = sadd.s32 1, %s16
    %s33 = scalar_select %p30, %s32, %s16
    %p34 = scmp.ge.s32.totalorder %s33, 2
    %s35 = scalar_select %p34, 0, %s33
    %s36 = ssub.s32 %s16, %s35
    %s37 = ssub.s32 %s17, %s31
    %s38 = sor.u32 %s36, %s37
    %s39 = ssub.s32 %s18, %s27
    %s40 = sor.u32 %s38, %s39
    %p41 = scmp.eq.s32.totalorder %s40, 0
    %s43 = sadd.s32 %s42, 1
    %s44 = scalar_select %p41, %s42, %s43
    %p47 = pneg %p41
    %p48 = scmp.eq.s32.totalorder %s9, 1
    %p49 = por %p47, %p48
    %p50 = scmp.ne.s32.totalorder %s42, %s45
    %p51 = scmp.eq.s32.totalorder %s9, 0
    %p52 = por %p50, %p51
    %p53 = scmp.ne.s32.totalorder %s42, %s45
    %p54 = scmp.eq.s32.totalorder %s14, 1
    %p55 = por %p53, %p54
    %p56 = scmp.ne.s32.totalorder %s45, %s46
    %p57 = scmp.eq.s32.totalorder %s14, 0
    %p58 = por %p56, %p57
    %p59 = scmp.ne.s32.totalorder %s45, %s46
    %p60 = scmp.eq.s32.totalorder %s15, 1
    %p61 = por %p59, %p60
    %p63 = scmp.ne.s32.totalorder %s46, %s62
    %p64 = scmp.eq.s32.totalorder %s15, 0
    %p65 = por %p63, %p64
    %s66 = ssub.s32 %s18, %s27
    %p67 = scmp.eq.s32.totalorder %s66, 0
    %s69 = sadd.s32 %s68, 1
    %s70 = scalar_select %p67, %s68, %s69
    %p73 = pneg %p67
    %p74 = scmp.eq.s32.totalorder %s9, 1
    %p75 = por %p73, %p74
    %p76 = scmp.ne.s32.totalorder %s68, %s71
    %p77 = scmp.eq.s32.totalorder %s9, 0
    %p78 = por %p76, %p77
    %p79 = scmp.ne.s32.totalorder %s68, %s71
    %p80 = scmp.eq.s32.totalorder %s14, 1
    %p81 = por %p79, %p80
    %p82 = scmp.ne.s32.totalorder %s71, %s72
    %p83 = scmp.eq.s32.totalorder %s14, 0
    %p84 = por %p82, %p83
    %p85 = scmp.ne.s32.totalorder %s71, %s72
    %p86 = scmp.eq.s32.totalorder %s15, 1
    %p87 = por %p85, %p86
    %p89 = scmp.ne.s32.totalorder %s72, %s88
    %p90 = scmp.eq.s32.totalorder %s15, 0
    %p91 = por %p89, %p90
    %s93 = sadd.s32 %s92, 1
    %p96 = scmp.eq.s32.totalorder %s9, 1
    %p97 = scmp.ne.s32.totalorder %s92, %s94
    %p98 = scmp.eq.s32.totalorder %s9, 0
    %p99 = por %p97, %p98
    %p100 = scmp.ne.s32.totalorder %s92, %s94
    %p101 = scmp.eq.s32.totalorder %s14, 1
    %p102 = por %p100, %p101
    %p103 = scmp.ne.s32.totalorder %s94, %s95
    %p104 = scmp.eq.s32.totalorder %s14, 0
    %p105 = por %p103, %p104
    %p106 = scmp.ne.s32.totalorder %s94, %s95
    %p107 = scmp.eq.s32.totalorder %s15, 1
    %p108 = por %p106, %p107
    %p110 = scmp.ne.s32.totalorder %s95, %s109
    %p111 = scmp.eq.s32.totalorder %s15, 0
    %p112 = por %p110, %p111
    %s113 = ssub.s32 %s16, %s35
    %s114 = ssub.s32 %s17, %s31
    %s115 = sor.u32 %s113, %s114
    %p116 = scmp.eq.s32.totalorder %s115, 0
    %s118 = sadd.s32 %s117, 1
    %s119 = scalar_select %p116, %s117, %s118
    %p122 = pneg %p116
    %p123 = scmp.eq.s32.totalorder %s9, 1
    %p124 = por %p122, %p123
    %p125 = scmp.ne.s32.totalorder %s117, %s120
    %p126 = scmp.eq.s32.totalorder %s9, 0
    %p127 = por %p125, %p126
    %p128 = scmp.ne.s32.totalorder %s117, %s120
    %p129 = scmp.eq.s32.totalorder %s14, 1
    %p130 = por %p128, %p129
    %p131 = scmp.ne.s32.totalorder %s120, %s121
    %p132 = scmp.eq.s32.totalorder %s14, 0
    %p133 = por %p131, %p132
    %p134 = scmp.ne.s32.totalorder %s120, %s121
    %p135 = scmp.eq.s32.totalorder %s15, 1
    %p136 = por %p134, %p135
    %p138 = scmp.ne.s32.totalorder %s121, %s137
    %p139 = scmp.eq.s32.totalorder %s15, 0
    %p140 = por %p138, %p139
    %p141 = scmp.le.s32.totalorder 1, %s9
    %p142 = scmp.lt.s32.totalorder %s9, 3
    %p143 = pnand %p141, %p142
    %p144 = pneg %p143
    // Predicated region
    $region9: #{_lambda_.6} parent=5 // pred_check
      _
    $region10: #{_lambda_.6} parent=5 // pred_check_branch
      %146 = sbr.rel (%p143) target = $region12
    $region11: #{_lambda_.6} parent=5 // pred_region
      %s147 = ssub.s32 %s9, 1
      // Predicated region
      $region13: #{_lambda_.6} parent=11 // pred_check
        %p148 = pneg %p84
      $region14: #{_lambda_.6} parent=11 // pred_check_branch
        %150 = sbr.rel (%p148) target = $region16
      $region15: #{_lambda_.6} parent=11 // pred_region
        %s151 = smul.u32 4, %s21
        %p152 = scmp.lt.s32.totalorder %s151, 3
        %s153 = scalar_select %p152, %s151, 3
        %s154 = smul.addr %s153, 8
        %s155 = scalar_lea.vmem %s1, %s154
        %s156 = smul.u32 4, %s21
      $region16: #{_lambda_.6} parent=11 // pred_fallthru
        _
      // Predicated region
      $region17: #{_lambda_.6} parent=11 // pred_check
        %p157 = pneg %p105
      $region18: #{_lambda_.6} parent=11 // pred_check_branch
        %159 = sbr.rel (%p157) target = $region20
      $region19: #{_lambda_.6} parent=11 // pred_region
        _
      $region20: #{_lambda_.6} parent=11 // pred_fallthru
        _
    $region12: #{_lambda_.6} parent=5 // pred_fallthru
      _
    %p160 = scmp.lt.s32.totalorder %s9, 2
    // Predicated region
    $region21: #{_lambda_.6} parent=5 // pred_check
      %p161 = pneg %p160
    $region22: #{_lambda_.6} parent=5 // pred_check_branch
      %163 = sbr.rel (%p161) target = $region24
    $region23: #{_lambda_.6} parent=5 // pred_region
      // Predicated region
      $region25: #{_lambda_.6} parent=23 // pred_check
        %p164 = pneg %p52
      $region26: #{_lambda_.6} parent=23 // pred_check_branch
        %166 = sbr.rel (%p164) target = $region28
      $region27: #{_lambda_.6} parent=23 // pred_region
        %p167 = scmp.lt.s32.totalorder %s16, 1
        %s168 = scalar_select %p167, %s16, 1
        %p169 = scmp.lt.s32.totalorder %s17, 0
        %s170 = scalar_select %p169, %s17, 0
        %p171 = scmp.lt.s32.totalorder %s18, 0
        %s172 = scalar_select %p171, %s18, 0
        %s173 = sadd.s32 %s172, %s170
        %s174 = sadd.s32 %s173, %s168
        %s175 = smul.addr %s174, 8
        %s176 = scalar_lea.vmem %s0, %s175
      $region28: #{_lambda_.6} parent=23 // pred_fallthru
        _
    $region24: #{_lambda_.6} parent=5 // pred_fallthru
      _
    %p177 = scmp.le.s32.totalorder 1, %s9
    %p178 = scmp.lt.s32.totalorder %s9, 3
    %p179 = pnand %p177, %p178
    %p180 = pneg %p179
    // Predicated region
    $region29: #{_lambda_.6} parent=5 // pred_check
      _
    $region30: #{_lambda_.6} parent=5 // pred_check_branch
      %182 = sbr.rel (%p179) target = $region32
    $region31: #{_lambda_.6} parent=5 // pred_region
      %s183 = ssub.s32 %s9, 1
      %p184 = scmp.lt.s32.totalorder %s19, 1
      %s185 = scalar_select %p184, %s19, 1
      %p186 = scmp.lt.s32.totalorder %s20, 0
      %s187 = scalar_select %p186, %s20, 0
      %p188 = scmp.lt.s32.totalorder %s21, 0
      %s189 = scalar_select %p188, %s21, 0
      %s190 = sadd.s32 %s189, %s187
      %s191 = sadd.s32 %s190, %s185
      %s192 = smul.addr %s191, 8
      %s193 = scalar_lea.vmem %s0, %s192
      %p194 = pneg %p58
      %p195 = pneg %p55
      %s196 = smul.u32 4, %s21
      %p197 = scmp.lt.s32.totalorder %s196, 3
      %s198 = scalar_select %p197, %s196, 3
      %s199 = smul.addr %s198, 8
      %s200 = scalar_lea.vmem %s1, %s199
      %p201 = pneg %p84
      %p202 = pneg %p81
      %p203 = pneg %p105
      %p204 = pneg %p102
      %p205 = pneg %p133
      %p206 = pneg %p130
      %p207 = scmp.lt.s32.totalorder %s19, 1
      %s208 = scalar_select %p207, %s19, 1
      %p209 = scmp.lt.s32.totalorder %s20, 0
      %s210 = scalar_select %p209, %s20, 0
      %s211 = smul.addr %s208, 4
      %s212 = sadd.s32 %s210, %s211
      %s213 = smul.addr %s212, 8
      %s214 = scalar_lea.vmem %s3, %s213
      %p215 = scmp.lt.s32.totalorder %s19, 1
      %s216 = scalar_select %p215, %s19, 1
      %p217 = scmp.lt.s32.totalorder %s20, 0
      %s218 = scalar_select %p217, %s20, 0
      %p219 = scmp.lt.s32.totalorder %s21, 0
      %s220 = scalar_select %p219, %s21, 0
      %s221 = sadd.s32 %s220, %s218
      %s222 = sadd.s32 %s221, %s216
      %s223 = smul.addr %s222, 8
      %s224 = scalar_lea.vmem %s0, %s223
      %s225 = smul.u32 4, %s21
      %p226 = scmp.lt.s32.totalorder %s225, 3
      %s227 = scalar_select %p226, %s225, 3
      %s228 = smul.addr %s227, 8
      %s229 = scalar_lea.vmem %s1, %s228
      %s230 = smul.u32 4, %s21
      %p231 = scmp.lt.s32.totalorder %s19, 1
      %s232 = scalar_select %p231, %s19, 1
      %p233 = scmp.lt.s32.totalorder %s20, 0
      %s234 = scalar_select %p233, %s20, 0
      %s235 = smul.addr %s232, 4
      %s236 = sadd.s32 %s234, %s235
      %s237 = smul.addr %s236, 8
      %s238 = scalar_lea.vmem %s3, %s237
      %p239 = scmp.eq.s32.totalorder %s21, 0
      // Predicated region
      $region33: #{_lambda_.6} parent=31 // pred_check
        %p240 = pneg %p239
      $region34: #{_lambda_.6} parent=31 // pred_check_branch
        %242 = sbr.rel (%p240) target = $region36
      $region35: #{_lambda_.6} parent=31 // pred_region
        %vm243 = vcmask 523264
        %244 = vst.msk [vmem:[#allocation2] sm:$0xff] %vm243, 0.0
      $region36: #{_lambda_.6} parent=31 // pred_fallthru
        _
      %v245 = vld [vmem:[#allocation2] sm:$0xff]
      %v246 = vld [vmem:[%s224] sm:$0xff]
      %v247 = vld [vmem:[%s229] sm:$0xff]
      %v248 = vld [vmem:[%s229 + $0x8] sm:$0xff]
      %v249 = vld [vmem:[%s229 + $0x10] sm:$0xff]
      %v250 = vld [vmem:[%s229 + $0x18] sm:$0xff]
      %vm251 = vcmask 261120
      %v253 = vsel %vm251, %v246, 0
      %255 = vmatprep.subr.mxu0 0.0
      %256 = vmatpush1.msra.mxu0 %v247
      %257 = vmatprep.subr.mxu0 0.0
      %258 = vmatpush1.msra.mxu0 %v248
      %259 = vmatprep.subr.mxu0 0.0
      %260 = vmatpush1.msra.mxu0 %v249
      %261 = vmatprep.subr.mxu0 0.0
      %262 = vmatpush1.msra.mxu0 %v250
      %263 = vmatprep.subr.mxu0 0.0
      %264 = vmatpush1.msra.mxu0 0.0
      %265 = vmatprep.subr.mxu0 0.0
      %266 = vmatpush1.msra.mxu0 0.0
      %267 = vmatprep.subr.mxu0 0.0
      %268 = vmatpush1.msra.mxu0 0.0
      %269 = vmatprep.subr.mxu0 0.0
      %270 = vmatpush1.msra.mxu0 0.0
      %271 = vmatprep.subr.mxu0 0.0
      %272 = vmatpush1.msra.mxu0 0.0
      %273 = vmatprep.subr.mxu0 0.0
      %274 = vmatpush1.msra.mxu0 0.0
      %275 = vmatprep.subr.mxu0 0.0
      %276 = vmatpush1.msra.mxu0 0.0
      %277 = vmatprep.subr.mxu0 0.0
      %278 = vmatpush1.msra.mxu0 0.0
      %279 = vmatprep.subr.mxu0 0.0
      %280 = vmatpush1.msra.mxu0 0.0
      %281 = vmatprep.subr.mxu0 0.0
      %282 = vmatpush1.msra.mxu0 0.0
      %283 = vmatprep.subr.mxu0 0.0
      %284 = vmatpush1.msra.mxu0 0.0
      %285 = vmatprep.subr.mxu0 0.0
      %286 = vmatpush1.msra.mxu0 0.0
      %287 = vmatprep.subr.mxu0 0.0
      %288 = vmatpush1.msra.mxu0 0.0
      %289 = vmatprep.subr.mxu0 0.0
      %290 = vmatpush1.msra.mxu0 0.0
      %291 = vmatprep.subr.mxu0 0.0
      %292 = vmatpush1.msra.mxu0 0.0
      %293 = vmatprep.subr.mxu0 0.0
      %294 = vmatpush1.msra.mxu0 0.0
      %295 = vmatprep.subr.mxu0 0.0
      %296 = vmatpush1.msra.mxu0 0.0
      %297 = vmatprep.subr.mxu0 0.0
      %298 = vmatpush1.msra.mxu0 0.0
      %299 = vmatprep.subr.mxu0 0.0
      %300 = vmatpush1.msra.mxu0 0.0
      %301 = vmatprep.subr.mxu0 0.0
      %302 = vmatpush1.msra.mxu0 0.0
      %303 = vmatprep.subr.mxu0 0.0
      %304 = vmatpush1.msra.mxu0 0.0
      %305 = vmatprep.subr.mxu0 0.0
      %306 = vmatpush1.msra.mxu0 0.0
      %307 = vmatprep.subr.mxu0 0.0
      %308 = vmatpush1.msra.mxu0 0.0
      %309 = vmatprep.subr.mxu0 0.0
      %310 = vmatpush1.msra.mxu0 0.0
      %311 = vmatprep.subr.mxu0 0.0
      %312 = vmatpush1.msra.mxu0 0.0
      %313 = vmatprep.subr.mxu0 0.0
      %314 = vmatpush1.msra.mxu0 0.0
      %315 = vmatprep.subr.mxu0 0.0
      %316 = vmatpush1.msra.mxu0 0.0
      %317 = vmatprep.subr.mxu0 0.0
      %318 = vmatpush1.msra.mxu0 0.0
      %319 = vmatprep.mubr.f32.mxu0 0.0
      %320 = vmatmul.mubr.f32.gmra.mrb[0].mxu0 %v253
      %v321 = vpop.f32.mrb[0].mxu0
      %v322 = vadd.f32 0.0, %v321
      %v323 = vpop.f32.mrb[0].mxu0
      %324 = vdwg.mxu0
      %v325 = vadd.f32 %v245, %v322
      %vm326 = vcmask 523264
      %327 = vst.msk [vmem:[#allocation2] sm:$0xff] %vm326, %v325
      // Predicated region
      $region37: #{_lambda_.6} parent=31 // pred_check
        %p328 = pneg %p239
      $region38: #{_lambda_.6} parent=31 // pred_check_branch
        %330 = sbr.rel (%p328) target = $region40
      $region39: #{_lambda_.6} parent=31 // pred_region
        %v331 = vld [vmem:[#allocation2] sm:$0xff]
        %v332 = vld [vmem:[%s2] sm:$0x1]
        %v334 = vlaneseq
        %v335 = vshrl.u32 %v334, 7
        %v336 = vsub.s32 0, %v335
        %v337 = vrot.slane %v332, %v336
        %v339 = vadd.f32 %v331, %v337
        %vm340 = vcmask 130048
        %341 = vst.msk [vmem:[%s238] sm:$0xff] %vm340, %v339
        %343 = vrot.lane.b32.xlu0 %v339, 112
        %v344 = vpop.permute.xlu0 %343
        %s346 = scalar_lea.vmem %s238, 8
        %347 = vst.msk [vmem:[%s346] sm:$0xff] %vm340, %v344
        %348 = vrot.lane.b32.xlu0 %v339, 96
        %v349 = vpop.permute.xlu0 %348
        %s351 = scalar_lea.vmem %s238, 16
        %352 = vst.msk [vmem:[%s351] sm:$0xff] %vm340, %v349
        %353 = vrot.lane.b32.xlu0 %v339, 80
        %v354 = vpop.permute.xlu0 %353
        %s356 = scalar_lea.vmem %s238, 24
        %357 = vst.msk [vmem:[%s356] sm:$0xff] %vm340, %v354
      $region40: #{_lambda_.6} parent=31 // pred_fallthru
        _
      %p358 = scmp.lt.s32.totalorder %s19, 1
      %s359 = scalar_select %p358, %s19, 1
      %p360 = scmp.lt.s32.totalorder %s20, 0
      %s361 = scalar_select %p360, %s20, 0
      %s362 = smul.addr %s359, 4
      %s363 = sadd.s32 %s361, %s362
      %s364 = smul.addr %s363, 8
      %s365 = scalar_lea.vmem %s3, %s364
      // Predicated region
      $region41: #{_lambda_.6} parent=31 // pred_check
        %p366 = pneg %p130
      $region42: #{_lambda_.6} parent=31 // pred_check_branch
        %368 = sbr.rel (%p366) target = $region44
      $region43: #{_lambda_.6} parent=31 // pred_region
        _
      $region44: #{_lambda_.6} parent=31 // pred_fallthru
        _
    $region32: #{_lambda_.6} parent=5 // pred_fallthru
      _
    %p369 = scmp.le.s32.totalorder 2, %s9
    // Predicated region
    $region45: #{_lambda_.6} parent=5 // pred_check
      %p370 = pneg %p369
    $region46: #{_lambda_.6} parent=5 // pred_check_branch
      %372 = sbr.rel (%p370) target = $region48
    $region47: #{_lambda_.6} parent=5 // pred_region
      %s373 = ssub.s32 %s9, 2
      // Predicated region
      $region49: #{_lambda_.6} parent=47 // pred_check
        %p374 = pneg %p136
      $region50: #{_lambda_.6} parent=47 // pred_check_branch
        %376 = sbr.rel (%p374) target = $region52
      $region51: #{_lambda_.6} parent=47 // pred_region
        %p377 = scmp.lt.s32.totalorder %s22, 1
        %s378 = scalar_select %p377, %s22, 1
        %p379 = scmp.lt.s32.totalorder %s23, 0
        %s380 = scalar_select %p379, %s23, 0
        %s381 = smul.addr %s378, 4
        %s382 = sadd.s32 %s380, %s381
        %s383 = smul.addr %s382, 8
        %s384 = scalar_lea.vmem %s3, %s383
      $region52: #{_lambda_.6} parent=47 // pred_fallthru
        _
    $region48: #{_lambda_.6} parent=5 // pred_fallthru
      _
  $region6: #{_lambda_.6} parent=0 // loop_footer
    %s13 = sadd.s32 1, %s9
  $region7: #{_lambda_.6} parent=0 // loop_footer_branch
    %8 = sbr.rel target = $region3
  $region8: #{_lambda_.6} parent=0 // loop_exit
    _

// kernel: _lambda_.8
$region0: #{_lambda_.8}
  #allocation0 [shape = 'u32[]', space=smem, size = 0x4, offset = 0x4, fixed_abs, tag = 'smem constant byte address 0x4 - core index']
  #allocation1 [shape = 'u32[144,128]{1,0:T(1,128)}', space=vmem, size = 0x12000, scoped, tag = 'internal scratch']
  #allocation2 [shape = 'f32[8,1]{1,0:T(8,128)}', space=vmem, size = 0x1000, scoped, tag = 'scratch operand']
  #allocation3 [shape = 'f32[8,1]{1,0:T(8,128)}', space=vmem, size = 0x1000, scoped, tag = 'scratch operand']
  #allocation4 [shape = 'f32[8,16]{1,0:T(8,128)}', space=vmem, size = 0x1000, scoped, tag = 'scratch operand']
  %s0 = inlined_call_operand.vmem [shape: f32[2,4,8,16], index: 0, kind: input, shape index: {}]
  %s1 = inlined_call_operand.vmem [shape: f32[2,4,8,16], index: 1, kind: input, shape index: {}]
  %s2 = inlined_call_operand.vmem [shape: f32[2,4,8,16], index: 2, kind: input, shape index: {}]
  %s3 = inlined_call_operand.vmem [shape: f32[2,4,8,16], index: 3, kind: output, shape index: {}]
  %s4 = sld [smem:[#allocation0]]
  $region53: #{_lambda_.8} parent=0
    _
  %s6 = ssub.s32 1, %s4
  %s7 = scalar_select 0, %s6, %s4
  loop: start=0, step=1, limit=10
  $region2: #{_lambda_.8} parent=0 // loop_pre_header
    _
  $region3: #{_lambda_.8} parent=0 // loop_header
    %s9 = sphi 0, %s13
    %p10 = scmp.ge.s32.totalorder %s9, 10
    %s16 = sphi 0, %s42
    %s17 = sphi 0, %s38
    %s18 = sphi 0, %s34
    %s19 = sphi 0, %s30
    %s20 = sphi 0, %s16
    %s21 = sphi 0, %s17
    %s22 = sphi 0, %s18
    %s23 = sphi 0, %s19
    %s24 = sphi 0, %s20
    %s25 = sphi 0, %s21
    %s26 = sphi 0, %s22
    %s27 = sphi 0, %s23
    %s49 = sphi 0, %s51
    %s52 = sphi 0, %s49
    %s53 = sphi 0, %s52
    %s69 = sphi 0, %s53
    %s79 = sphi 0, %s81
    %s82 = sphi 0, %s79
    %s83 = sphi 0, %s82
    %s99 = sphi 0, %s83
    %s109 = sphi 0, %s111
    %s112 = sphi 0, %s109
    %s113 = sphi 0, %s112
    %s129 = sphi 0, %s113
    %s139 = sphi 0, %s141
    %s142 = sphi 0, %s139
    %s143 = sphi 0, %s142
    %s159 = sphi 0, %s143
  $region4: #{_lambda_.8} parent=0 // loop_header_branch
    %12 = sbr.rel (%p10) target = $region8
  $region5: #{_lambda_.8} parent=0 // loop_body
    %s14 = ssub.s32 %s9, 1
    %s15 = ssub.s32 %s9, 2
    %s28 = sadd.s32 1, %s19
    %p29 = scmp.ge.s32.totalorder %s28, 1
    %s30 = scalar_select %p29, 0, %s28
    %s31 = sadd.s32 1, %s18
    %s32 = scalar_select %p29, %s31, %s18
    %p33 = scmp.ge.s32.totalorder %s32, 1
    %s34 = scalar_select %p33, 0, %s32
    %s35 = sadd.s32 1, %s17
    %s36 = scalar_select %p33, %s35, %s17
    %p37 = scmp.ge.s32.totalorder %s36, 4
    %s38 = scalar_select %p37, 0, %s36
    %s39 = sadd.s32 1, %s16
    %s40 = scalar_select %p37, %s39, %s16
    %p41 = scmp.ge.s32.totalorder %s40, 2
    %s42 = scalar_select %p41, 0, %s40
    %s43 = ssub.s32 %s16, %s42
    %s44 = ssub.s32 %s17, %s38
    %s45 = sor.u32 %s43, %s44
    %s46 = ssub.s32 %s18, %s34
    %s47 = sor.u32 %s45, %s46
    %p48 = scmp.eq.s32.totalorder %s47, 0
    %s50 = sadd.s32 %s49, 1
    %s51 = scalar_select %p48, %s49, %s50
    %p54 = pneg %p48
    %p55 = scmp.eq.s32.totalorder %s9, 7
    %p56 = por %p54, %p55
    %p57 = scmp.ne.s32.totalorder %s49, %s52
    %p58 = scmp.eq.s32.totalorder %s9, 0
    %p59 = por %p57, %p58
    %p60 = scmp.ne.s32.totalorder %s49, %s52
    %p61 = scmp.eq.s32.totalorder %s14, 7
    %p62 = por %p60, %p61
    %p63 = scmp.ne.s32.totalorder %s52, %s53
    %p64 = scmp.eq.s32.totalorder %s14, 0
    %p65 = por %p63, %p64
    %p66 = scmp.ne.s32.totalorder %s52, %s53
    %p67 = scmp.eq.s32.totalorder %s15, 7
    %p68 = por %p66, %p67
    %p70 = scmp.ne.s32.totalorder %s53, %s69
    %p71 = scmp.eq.s32.totalorder %s15, 0
    %p72 = por %p70, %p71
    %s73 = ssub.s32 %s16, %s42
    %s74 = ssub.s32 %s17, %s38
    %s75 = sor.u32 %s73, %s74
    %s76 = ssub.s32 %s19, %s30
    %s77 = sor.u32 %s75, %s76
    %p78 = scmp.eq.s32.totalorder %s77, 0
    %s80 = sadd.s32 %s79, 1
    %s81 = scalar_select %p78, %s79, %s80
    %p84 = pneg %p78
    %p85 = scmp.eq.s32.totalorder %s9, 7
    %p86 = por %p84, %p85
    %p87 = scmp.ne.s32.totalorder %s79, %s82
    %p88 = scmp.eq.s32.totalorder %s9, 0
    %p89 = por %p87, %p88
    %p90 = scmp.ne.s32.totalorder %s79, %s82
    %p91 = scmp.eq.s32.totalorder %s14, 7
    %p92 = por %p90, %p91
    %p93 = scmp.ne.s32.totalorder %s82, %s83
    %p94 = scmp.eq.s32.totalorder %s14, 0
    %p95 = por %p93, %p94
    %p96 = scmp.ne.s32.totalorder %s82, %s83
    %p97 = scmp.eq.s32.totalorder %s15, 7
    %p98 = por %p96, %p97
    %p100 = scmp.ne.s32.totalorder %s83, %s99
    %p101 = scmp.eq.s32.totalorder %s15, 0
    %p102 = por %p100, %p101
    %s103 = ssub.s32 %s16, %s42
    %s104 = ssub.s32 %s17, %s38
    %s105 = sor.u32 %s103, %s104
    %s106 = ssub.s32 %s19, %s30
    %s107 = sor.u32 %s105, %s106
    %p108 = scmp.eq.s32.totalorder %s107, 0
    %s110 = sadd.s32 %s109, 1
    %s111 = scalar_select %p108, %s109, %s110
    %p114 = pneg %p108
    %p115 = scmp.eq.s32.totalorder %s9, 7
    %p116 = por %p114, %p115
    %p117 = scmp.ne.s32.totalorder %s109, %s112
    %p118 = scmp.eq.s32.totalorder %s9, 0
    %p119 = por %p117, %p118
    %p120 = scmp.ne.s32.totalorder %s109, %s112
    %p121 = scmp.eq.s32.totalorder %s14, 7
    %p122 = por %p120, %p121
    %p123 = scmp.ne.s32.totalorder %s112, %s113
    %p124 = scmp.eq.s32.totalorder %s14, 0
    %p125 = por %p123, %p124
    %p126 = scmp.ne.s32.totalorder %s112, %s113
    %p127 = scmp.eq.s32.totalorder %s15, 7
    %p128 = por %p126, %p127
    %p130 = scmp.ne.s32.totalorder %s113, %s129
    %p131 = scmp.eq.s32.totalorder %s15, 0
    %p132 = por %p130, %p131
    %s133 = ssub.s32 %s16, %s42
    %s134 = ssub.s32 %s17, %s38
    %s135 = sor.u32 %s133, %s134
    %s136 = ssub.s32 %s18, %s34
    %s137 = sor.u32 %s135, %s136
    %p138 = scmp.eq.s32.totalorder %s137, 0
    %s140 = sadd.s32 %s139, 1
    %s141 = scalar_select %p138, %s139, %s140
    %p144 = pneg %p138
    %p145 = scmp.eq.s32.totalorder %s9, 7
    %p146 = por %p144, %p145
    %p147 = scmp.ne.s32.totalorder %s139, %s142
    %p148 = scmp.eq.s32.totalorder %s9, 0
    %p149 = por %p147, %p148
    %p150 = scmp.ne.s32.totalorder %s139, %s142
    %p151 = scmp.eq.s32.totalorder %s14, 7
    %p152 = por %p150, %p151
    %p153 = scmp.ne.s32.totalorder %s142, %s143
    %p154 = scmp.eq.s32.totalorder %s14, 0
    %p155 = por %p153, %p154
    %p156 = scmp.ne.s32.totalorder %s142, %s143
    %p157 = scmp.eq.s32.totalorder %s15, 7
    %p158 = por %p156, %p157
    %p160 = scmp.ne.s32.totalorder %s143, %s159
    %p161 = scmp.eq.s32.totalorder %s15, 0
    %p162 = por %p160, %p161
    %p163 = scmp.le.s32.totalorder 1, %s9
    %p164 = scmp.lt.s32.totalorder %s9, 9
    %p165 = pnand %p163, %p164
    %p166 = pneg %p165
    // Predicated region
    $region9: #{_lambda_.8} parent=5 // pred_check
      _
    $region10: #{_lambda_.8} parent=5 // pred_check_branch
      %168 = sbr.rel (%p165) target = $region12
    $region11: #{_lambda_.8} parent=5 // pred_region
      %s169 = ssub.s32 %s9, 1
    $region12: #{_lambda_.8} parent=5 // pred_fallthru
      _
    %p170 = scmp.lt.s32.totalorder %s9, 8
    // Predicated region
    $region13: #{_lambda_.8} parent=5 // pred_check
      %p171 = pneg %p170
    $region14: #{_lambda_.8} parent=5 // pred_check_branch
      %173 = sbr.rel (%p171) target = $region16
    $region15: #{_lambda_.8} parent=5 // pred_region
      // Predicated region
      $region17: #{_lambda_.8} parent=15 // pred_check
        %p174 = pneg %p59
      $region18: #{_lambda_.8} parent=15 // pred_check_branch
        %176 = sbr.rel (%p174) target = $region20
      $region19: #{_lambda_.8} parent=15 // pred_region
        %p177 = scmp.lt.s32.totalorder %s16, 1
        %s178 = scalar_select %p177, %s16, 1
        %p179 = scmp.lt.s32.totalorder %s17, 3
        %s180 = scalar_select %p179, %s17, 3
        %p181 = scmp.lt.s32.totalorder %s18, 0
        %s182 = scalar_select %p181, %s18, 0
        %s183 = sadd.s32 %s182, %s180
        %s184 = smul.addr %s178, 4
        %s185 = sadd.s32 %s183, %s184
        %s186 = smul.addr %s185, 8
        %s187 = scalar_lea.vmem %s0, %s186
      $region20: #{_lambda_.8} parent=15 // pred_fallthru
        _
      // Predicated region
      $region21: #{_lambda_.8} parent=15 // pred_check
        %p188 = pneg %p89
      $region22: #{_lambda_.8} parent=15 // pred_check_branch
        %190 = sbr.rel (%p188) target = $region24
      $region23: #{_lambda_.8} parent=15 // pred_region
        %p191 = scmp.lt.s32.totalorder %s16, 1
        %s192 = scalar_select %p191, %s16, 1
        %p193 = scmp.lt.s32.totalorder %s17, 3
        %s194 = scalar_select %p193, %s17, 3
        %p195 = scmp.lt.s32.totalorder %s19, 0
        %s196 = scalar_select %p195, %s19, 0
        %s197 = sadd.s32 %s196, %s194
        %s198 = smul.addr %s192, 4
        %s199 = sadd.s32 %s197, %s198
        %s200 = smul.addr %s199, 8
        %s201 = scalar_lea.vmem %s1, %s200
      $region24: #{_lambda_.8} parent=15 // pred_fallthru
        _
      // Predicated region
      $region25: #{_lambda_.8} parent=15 // pred_check
        %p202 = pneg %p119
      $region26: #{_lambda_.8} parent=15 // pred_check_branch
        %204 = sbr.rel (%p202) target = $region28
      $region27: #{_lambda_.8} parent=15 // pred_region
        %p205 = scmp.lt.s32.totalorder %s16, 1
        %s206 = scalar_select %p205, %s16, 1
        %p207 = scmp.lt.s32.totalorder %s17, 3
        %s208 = scalar_select %p207, %s17, 3
        %p209 = scmp.lt.s32.totalorder %s19, 0
        %s210 = scalar_select %p209, %s19, 0
        %s211 = sadd.s32 %s210, %s208
        %s212 = smul.addr %s206, 4
        %s213 = sadd.s32 %s211, %s212
        %s214 = smul.addr %s213, 8
        %s215 = scalar_lea.vmem %s2, %s214
      $region28: #{_lambda_.8} parent=15 // pred_fallthru
        _
    $region16: #{_lambda_.8} parent=5 // pred_fallthru
      _
    %p216 = scmp.le.s32.totalorder 1, %s9
    %p217 = scmp.lt.s32.totalorder %s9, 9
    %p218 = pnand %p216, %p217
    %p219 = pneg %p218
    // Predicated region
    $region29: #{_lambda_.8} parent=5 // pred_check
      _
    $region30: #{_lambda_.8} parent=5 // pred_check_branch
      %221 = sbr.rel (%p218) target = $region32
    $region31: #{_lambda_.8} parent=5 // pred_region
      %s222 = ssub.s32 %s9, 1
      %p223 = scmp.lt.s32.totalorder %s20, 1
      %s224 = scalar_select %p223, %s20, 1
      %p225 = scmp.lt.s32.totalorder %s21, 3
      %s226 = scalar_select %p225, %s21, 3
      %p227 = scmp.lt.s32.totalorder %s22, 0
      %s228 = scalar_select %p227, %s22, 0
      %s229 = sadd.s32 %s228, %s226
      %s230 = smul.addr %s224, 4
      %s231 = sadd.s32 %s229, %s230
      %s232 = smul.addr %s231, 8
      %s233 = scalar_lea.vmem %s0, %s232
      %p234 = pneg %p65
      %p235 = pneg %p62
      %p236 = scmp.lt.s32.totalorder %s20, 1
      %s237 = scalar_select %p236, %s20, 1
      %p238 = scmp.lt.s32.totalorder %s21, 3
      %s239 = scalar_select %p238, %s21, 3
      %p240 = scmp.lt.s32.totalorder %s23, 0
      %s241 = scalar_select %p240, %s23, 0
      %s242 = sadd.s32 %s241, %s239
      %s243 = smul.addr %s237, 4
      %s244 = sadd.s32 %s242, %s243
      %s245 = smul.addr %s244, 8
      %s246 = scalar_lea.vmem %s1, %s245
      %p247 = pneg %p95
      %p248 = pneg %p92
      %p249 = scmp.lt.s32.totalorder %s20, 1
      %s250 = scalar_select %p249, %s20, 1
      %p251 = scmp.lt.s32.totalorder %s21, 3
      %s252 = scalar_select %p251, %s21, 3
      %p253 = scmp.lt.s32.totalorder %s23, 0
      %s254 = scalar_select %p253, %s23, 0
      %s255 = sadd.s32 %s254, %s252
      %s256 = smul.addr %s250, 4
      %s257 = sadd.s32 %s255, %s256
      %s258 = smul.addr %s257, 8
      %s259 = scalar_lea.vmem %s2, %s258
      %p260 = pneg %p125
      %p261 = pneg %p122
      %p262 = pneg %p155
      %p263 = pneg %p152
      %p264 = scmp.lt.s32.totalorder %s20, 1
      %s265 = scalar_select %p264, %s20, 1
      %p266 = scmp.lt.s32.totalorder %s21, 3
      %s267 = scalar_select %p266, %s21, 3
      %p268 = scmp.lt.s32.totalorder %s22, 0
      %s269 = scalar_select %p268, %s22, 0
      %s270 = sadd.s32 %s269, %s267
      %s271 = smul.addr %s265, 4
      %s272 = sadd.s32 %s270, %s271
      %s273 = smul.addr %s272, 8
      %s274 = scalar_lea.vmem %s3, %s273
      %p275 = scmp.lt.s32.totalorder %s20, 1
      %s276 = scalar_select %p275, %s20, 1
      %p277 = scmp.lt.s32.totalorder %s21, 3
      %s278 = scalar_select %p277, %s21, 3
      %p279 = scmp.lt.s32.totalorder %s22, 0
      %s280 = scalar_select %p279, %s22, 0
      %s281 = sadd.s32 %s280, %s278
      %s282 = smul.addr %s276, 4
      %s283 = sadd.s32 %s281, %s282
      %s284 = smul.addr %s283, 8
      %s285 = scalar_lea.vmem %s0, %s284
      %p286 = scmp.lt.s32.totalorder %s20, 1
      %s287 = scalar_select %p286, %s20, 1
      %p288 = scmp.lt.s32.totalorder %s21, 3
      %s289 = scalar_select %p288, %s21, 3
      %p290 = scmp.lt.s32.totalorder %s23, 0
      %s291 = scalar_select %p290, %s23, 0
      %s292 = sadd.s32 %s291, %s289
      %s293 = smul.addr %s287, 4
      %s294 = sadd.s32 %s292, %s293
      %s295 = smul.addr %s294, 8
      %s296 = scalar_lea.vmem %s1, %s295
      %p297 = scmp.lt.s32.totalorder %s20, 1
      %s298 = scalar_select %p297, %s20, 1
      %p299 = scmp.lt.s32.totalorder %s21, 3
      %s300 = scalar_select %p299, %s21, 3
      %p301 = scmp.lt.s32.totalorder %s23, 0
      %s302 = scalar_select %p301, %s23, 0
      %s303 = sadd.s32 %s302, %s300
      %s304 = smul.addr %s298, 4
      %s305 = sadd.s32 %s303, %s304
      %s306 = smul.addr %s305, 8
      %s307 = scalar_lea.vmem %s2, %s306
      %p308 = scmp.lt.s32.totalorder %s20, 1
      %s309 = scalar_select %p308, %s20, 1
      %p310 = scmp.lt.s32.totalorder %s21, 3
      %s311 = scalar_select %p310, %s21, 3
      %p312 = scmp.lt.s32.totalorder %s22, 0
      %s313 = scalar_select %p312, %s22, 0
      %s314 = sadd.s32 %s313, %s311
      %s315 = smul.addr %s309, 4
      %s316 = sadd.s32 %s314, %s315
      %s317 = smul.addr %s316, 8
      %s318 = scalar_lea.vmem %s3, %s317
      %p319 = scmp.eq.s32.totalorder %s23, 0
      // Predicated region
      $region33: #{_lambda_.8} parent=31 // pred_check
        %p320 = pneg %p319
      $region34: #{_lambda_.8} parent=31 // pred_check_branch
        %322 = sbr.rel (%p320) target = $region36
      $region35: #{_lambda_.8} parent=31 // pred_region
        %vm323 = vcmask 7168
        %324 = vst.msk [vmem:[#allocation2] sm:$0xff] %vm323, -inf
        %325 = vst.msk [vmem:[#allocation3] sm:$0xff] %vm323, 0.0
        %vm326 = vcmask 130048
        %327 = vst.msk [vmem:[#allocation4] sm:$0xff] %vm326, 0.0
      $region36: #{_lambda_.8} parent=31 // pred_fallthru
        _
      %v328 = vld [vmem:[%s285] sm:$0xff]
      %v329 = vmul.f32 %v328, 0.25
      %v330 = vld [vmem:[%s296] sm:$0xff]
      %v331 = vld [vmem:[%s307] sm:$0xff]
      %vm332 = vcmask 130048
      %v334 = vsel %vm332, %v329, 0
      %v337 = vsel %vm332, %v330, 0
      %339 = vmatprep.subr.mxu0 0.0
      %340 = vmatpush1.xpose.msra.mxu0 %v337
      %341 = vmatprep.subr.mxu0 0.0
      %342 = vmatpush1.xpose.msra.mxu0 0.0
      %343 = vmatprep.subr.mxu0 0.0
      %344 = vmatpush1.xpose.msra.mxu0 0.0
      %345 = vmatprep.subr.mxu0 0.0
      %346 = vmatpush1.xpose.msra.mxu0 0.0
      %347 = vmatprep.subr.mxu0 0.0
      %348 = vmatpush1.xpose.msra.mxu0 0.0
      %349 = vmatprep.subr.mxu0 0.0
      %350 = vmatpush1.xpose.msra.mxu0 0.0
      %351 = vmatprep.subr.mxu0 0.0
      %352 = vmatpush1.xpose.msra.mxu0 0.0
      %353 = vmatprep.subr.mxu0 0.0
      %354 = vmatpush1.xpose.msra.mxu0 0.0
      %355 = vmatprep.subr.mxu0 0.0
      %356 = vmatpush1.xpose.msra.mxu0 0.0
      %357 = vmatprep.subr.mxu0 0.0
      %358 = vmatpush1.xpose.msra.mxu0 0.0
      %359 = vmatprep.subr.mxu0 0.0
      %360 = vmatpush1.xpose.msra.mxu0 0.0
      %361 = vmatprep.subr.mxu0 0.0
      %362 = vmatpush1.xpose.msra.mxu0 0.0
      %363 = vmatprep.subr.mxu0 0.0
      %364 = vmatpush1.xpose.msra.mxu0 0.0
      %365 = vmatprep.subr.mxu0 0.0
      %366 = vmatpush1.xpose.msra.mxu0 0.0
      %367 = vmatprep.subr.mxu0 0.0
      %368 = vmatpush1.xpose.msra.mxu0 0.0
      %369 = vmatprep.subr.mxu0 0.0
      %370 = vmatpush1.xpose.msra.mxu0 0.0
      %371 = vmatprep.subr.mxu0 0.0
      %372 = vmatpush1.xpose.msra.mxu0 0.0
      %373 = vmatprep.subr.mxu0 0.0
      %374 = vmatpush1.xpose.msra.mxu0 0.0
      %375 = vmatprep.subr.mxu0 0.0
      %376 = vmatpush1.xpose.msra.mxu0 0.0
      %377 = vmatprep.subr.mxu0 0.0
      %378 = vmatpush1.xpose.msra.mxu0 0.0
      %379 = vmatprep.subr.mxu0 0.0
      %380 = vmatpush1.xpose.msra.mxu0 0.0
      %381 = vmatprep.subr.mxu0 0.0
      %382 = vmatpush1.xpose.msra.mxu0 0.0
      %383 = vmatprep.subr.mxu0 0.0
      %384 = vmatpush1.xpose.msra.mxu0 0.0
      %385 = vmatprep.subr.mxu0 0.0
      %386 = vmatpush1.xpose.msra.mxu0 0.0
      %387 = vmatprep.subr.mxu0 0.0
      %388 = vmatpush1.xpose.msra.mxu0 0.0
      %389 = vmatprep.subr.mxu0 0.0
      %390 = vmatpush1.xpose.msra.mxu0 0.0
      %391 = vmatprep.subr.mxu0 0.0
      %392 = vmatpush1.xpose.msra.mxu0 0.0
      %393 = vmatprep.subr.mxu0 0.0
      %394 = vmatpush1.xpose.msra.mxu0 0.0
      %395 = vmatprep.subr.mxu0 0.0
      %396 = vmatpush1.xpose.msra.mxu0 0.0
      %397 = vmatprep.subr.mxu0 0.0
      %398 = vmatpush1.xpose.msra.mxu0 0.0
      %399 = vmatprep.subr.mxu0 0.0
      %400 = vmatpush1.xpose.msra.mxu0 0.0
      %401 = vmatprep.subr.mxu0 0.0
      %402 = vmatpush1.xpose.msra.mxu0 0.0
      %403 = vmatprep.mubr.f32.mxu0 0.0
      %404 = vmatmul.mubr.f32.gmra.mrb[0].mxu0 %v334
      %v405 = vpop.f32.mrb[0].mxu0
      %v406 = vadd.f32 0.0, %v405
      %v407 = vpop.f32.mrb[0].mxu0
      %408 = vdwg.mxu0
      %v409 = vld [vmem:[#allocation2] sm:$0xff]
      %vm410 = vcmask 64512
      %v411 = vsel %vm410, %v406, -inf
      %412 = vmax.xlane.f32.xlu0 %v411
      %v413 = vpop.xlane.xlu0 %412
      %v414 = vmax.f32 %v409, %v413
      %v415 = vsub.f32 %v409, %v414
      %v416 = vmul.f32 %v415, 1.442695
      %v417 = vpow.pop %v416
      %419 = vset.pattern.permute.xlu0 0
      %420 = vperm.xlu0 %419, %v414
      %v421 = vpop.permute.xlu0 %420
      %v423 = vsub.f32 %v406, %v421
      %v424 = vmul.f32 %v423, 1.442695
      %v425 = vpow.pop %v424
      %v426 = vld [vmem:[#allocation3] sm:$0xff]
      %v427 = vmul.f32 %v417, %v426
      %v428 = vsel %vm410, %v425, 0.0
      %429 = vadd.xlane.f32.xlu0 %v428
      %v430 = vpop.xlane.xlu0 %429
      %v431 = vadd.f32 %v427, %v430
      %vm432 = vcmask 7168
      %433 = vst.msk [vmem:[#allocation3] sm:$0xff] %vm432, %v431
      %v434 = vld [vmem:[#allocation4] sm:$0xff]
      %436 = vset.pattern.permute.xlu0 0
      %437 = vperm.xlu0 %436, %v417
      %v438 = vpop.permute.xlu0 %437
      %v440 = vmul.f32 %v438, %v434
      %v442 = vsel %vm410, %v425, 0
      %444 = vmatprep.subr.mxu0 0.0
      %445 = vmatpush1.msra.mxu0 %v331
      %446 = vmatprep.subr.mxu0 0.0
      %447 = vmatpush1.msra.mxu0 0.0
      %448 = vmatprep.subr.mxu0 0.0
      %449 = vmatpush1.msra.mxu0 0.0
      %450 = vmatprep.subr.mxu0 0.0
      %451 = vmatpush1.msra.mxu0 0.0
      %452 = vmatprep.subr.mxu0 0.0
      %453 = vmatpush1.msra.mxu0 0.0
      %454 = vmatprep.subr.mxu0 0.0
      %455 = vmatpush1.msra.mxu0 0.0
      %456 = vmatprep.subr.mxu0 0.0
      %457 = vmatpush1.msra.mxu0 0.0
      %458 = vmatprep.subr.mxu0 0.0
      %459 = vmatpush1.msra.mxu0 0.0
      %460 = vmatprep.subr.mxu0 0.0
      %461 = vmatpush1.msra.mxu0 0.0
      %462 = vmatprep.subr.mxu0 0.0
      %463 = vmatpush1.msra.mxu0 0.0
      %464 = vmatprep.subr.mxu0 0.0
      %465 = vmatpush1.msra.mxu0 0.0
      %466 = vmatprep.subr.mxu0 0.0
      %467 = vmatpush1.msra.mxu0 0.0
      %468 = vmatprep.subr.mxu0 0.0
      %469 = vmatpush1.msra.mxu0 0.0
      %470 = vmatprep.subr.mxu0 0.0
      %471 = vmatpush1.msra.mxu0 0.0
      %472 = vmatprep.subr.mxu0 0.0
      %473 = vmatpush1.msra.mxu0 0.0
      %474 = vmatprep.subr.mxu0 0.0
      %475 = vmatpush1.msra.mxu0 0.0
      %476 = vmatprep.subr.mxu0 0.0
      %477 = vmatpush1.msra.mxu0 0.0
      %478 = vmatprep.subr.mxu0 0.0
      %479 = vmatpush1.msra.mxu0 0.0
      %480 = vmatprep.subr.mxu0 0.0
      %481 = vmatpush1.msra.mxu0 0.0
      %482 = vmatprep.subr.mxu0 0.0
      %483 = vmatpush1.msra.mxu0 0.0
      %484 = vmatprep.subr.mxu0 0.0
      %485 = vmatpush1.msra.mxu0 0.0
      %486 = vmatprep.subr.mxu0 0.0
      %487 = vmatpush1.msra.mxu0 0.0
      %488 = vmatprep.subr.mxu0 0.0
      %489 = vmatpush1.msra.mxu0 0.0
      %490 = vmatprep.subr.mxu0 0.0
      %491 = vmatpush1.msra.mxu0 0.0
      %492 = vmatprep.subr.mxu0 0.0
      %493 = vmatpush1.msra.mxu0 0.0
      %494 = vmatprep.subr.mxu0 0.0
      %495 = vmatpush1.msra.mxu0 0.0
      %496 = vmatprep.subr.mxu0 0.0
      %497 = vmatpush1.msra.mxu0 0.0
      %498 = vmatprep.subr.mxu0 0.0
      %499 = vmatpush1.msra.mxu0 0.0
      %500 = vmatprep.subr.mxu0 0.0
      %501 = vmatpush1.msra.mxu0 0.0
      %502 = vmatprep.subr.mxu0 0.0
      %503 = vmatpush1.msra.mxu0 0.0
      %504 = vmatprep.subr.mxu0 0.0
      %505 = vmatpush1.msra.mxu0 0.0
      %506 = vmatprep.subr.mxu0 0.0
      %507 = vmatpush1.msra.mxu0 0.0
      %508 = vmatprep.mubr.f32.mxu0 0.0
      %509 = vmatmul.mubr.f32.gmra.mrb[0].mxu0 %v442
      %v510 = vpop.f32.mrb[0].mxu0
      %v511 = vadd.f32 0.0, %v510
      %v512 = vpop.f32.mrb[0].mxu0
      %513 = vdwg.mxu0
      %v514 = vadd.f32 %v440, %v511
      %515 = vst.msk [vmem:[#allocation4] sm:$0xff] %vm332, %v514
      %516 = vst.msk [vmem:[#allocation2] sm:$0xff] %vm432, %v414
      // Predicated region
      $region37: #{_lambda_.8} parent=31 // pred_check
        %p517 = pneg %p319
      $region38: #{_lambda_.8} parent=31 // pred_check_branch
        %519 = sbr.rel (%p517) target = $region40
      $region39: #{_lambda_.8} parent=31 // pred_region
        %v520 = vld [vmem:[#allocation3] sm:$0xff]
        %v521 = vrcp.pop %v520
        %v522 = vld [vmem:[#allocation4] sm:$0xff]
        %524 = vset.pattern.permute.xlu0 0
        %525 = vperm.xlu0 %524, %v521
        %v526 = vpop.permute.xlu0 %525
        %v528 = vmul.f32 %v522, %v526
        %529 = vst.msk [vmem:[%s318] sm:$0xff] %vm332, %v528
      $region40: #{_lambda_.8} parent=31 // pred_fallthru
        _
      %p530 = scmp.lt.s32.totalorder %s20, 1
      %s531 = scalar_select %p530, %s20, 1
      %p532 = scmp.lt.s32.totalorder %s21, 3
      %s533 = scalar_select %p532, %s21, 3
      %p534 = scmp.lt.s32.totalorder %s22, 0
      %s535 = scalar_select %p534, %s22, 0
      %s536 = sadd.s32 %s535, %s533
      %s537 = smul.addr %s531, 4
      %s538 = sadd.s32 %s536, %s537
      %s539 = smul.addr %s538, 8
      %s540 = scalar_lea.vmem %s3, %s539
      // Predicated region
      $region41: #{_lambda_.8} parent=31 // pred_check
        %p541 = pneg %p152
      $region42: #{_lambda_.8} parent=31 // pred_check_branch
        %543 = sbr.rel (%p541) target = $region44
      $region43: #{_lambda_.8} parent=31 // pred_region
        _
      $region44: #{_lambda_.8} parent=31 // pred_fallthru
        _
    $region32: #{_lambda_.8} parent=5 // pred_fallthru
      _
    %p544 = scmp.le.s32.totalorder 2, %s9
    // Predicated region
    $region45: #{_lambda_.8} parent=5 // pred_check
      %p545 = pneg %p544
    $region46: #{_lambda_.8} parent=5 // pred_check_branch
      %547 = sbr.rel (%p545) target = $region48
    $region47: #{_lambda_.8} parent=5 // pred_region
      %s548 = ssub.s32 %s9, 2
      // Predicated region
      $region49: #{_lambda_.8} parent=47 // pred_check
        %p549 = pneg %p158
      $region50: #{_lambda_.8} parent=47 // pred_check_branch
        %551 = sbr.rel (%p549) target = $region52
      $region51: #{_lambda_.8} parent=47 // pred_region
        %p552 = scmp.lt.s32.totalorder %s24, 1
        %s553 = scalar_select %p552, %s24, 1
        %p554 = scmp.lt.s32.totalorder %s25, 3
        %s555 = scalar_select %p554, %s25, 3
        %p556 = scmp.lt.s32.totalorder %s26, 0
        %s557 = scalar_select %p556, %s26, 0
        %s558 = sadd.s32 %s557, %s555
        %s559 = smul.addr %s553, 4
        %s560 = sadd.s32 %s558, %s559
        %s561 = smul.addr %s560, 8
        %s562 = scalar_lea.vmem %s3, %s561
      $region52: #{_lambda_.8} parent=47 // pred_fallthru
        _
    $region48: #{_lambda_.8} parent=5 // pred_fallthru
      _
  $region6: #{_lambda_.8} parent=0 // loop_footer
    %s13 = sadd.s32 1, %s9
  $region7: #{_lambda_.8} parent=0 // loop_footer_branch
    %8 = sbr.rel target = $region3
  $region8: #{_lambda_.8} parent=0 // loop_exit
    _

// kernel: _lambda_.9
$region0: #{_lambda_.9}
  #allocation0 [shape = 'u32[]', space=smem, size = 0x4, offset = 0x4, fixed_abs, tag = 'smem constant byte address 0x4 - core index']
  #allocation1 [shape = 'u32[144,128]{1,0:T(1,128)}', space=vmem, size = 0x12000, scoped, tag = 'internal scratch']
  %s0 = inlined_call_operand.vmem [shape: f32[2,4,8,16], index: 0, kind: input, shape index: {}]
  %s1 = inlined_call_operand.vmem [shape: f32[64,32], index: 1, kind: input, shape index: {}]
  %s2 = inlined_call_operand.vmem [shape: f32[1,32], index: 2, kind: input, shape index: {}]
  %s3 = inlined_call_operand.hbm [shape: f32[2,8,32], index: 3, kind: output, shape index: {}]
  %s4 = sld [smem:[#allocation0]]
  $region45: #{_lambda_.9} parent=0
    _
  %s6 = ssub.s32 1, %s4
  %s7 = scalar_select 0, %s6, %s4
  $region1: #{_lambda_.9} parent=0
    #allocation2 [shape = 'u8[8192]{0}', space=vmem, size = 0x2000, scoped, tag = 'output window, operand 0']
    #allocation3 [shape = 's32[2]{0}', space=sflag, size = 0x8, scoped, tag = 'scoped memory for _lambda_.9']
    %8 = vsyncpa [#allocation3], 0
    %s9 = scalar_lea.sflag [#allocation3], 1
    %10 = vsyncpa %s9, 0
    loop: start=0, step=1, limit=4
    $region2: #{_lambda_.9} parent=1 // loop_pre_header
      _
    $region3: #{_lambda_.9} parent=1 // loop_header
      %s12 = sphi 0, %s16
      %p13 = scmp.ge.s32.totalorder %s12, 4
      %s19 = sphi 0, %s38
      %s20 = sphi 0, %s34
      %s21 = sphi 0, %s30
      %s22 = sphi 0, %s19
      %s23 = sphi 0, %s20
      %s24 = sphi 0, %s21
      %s25 = sphi 0, %s22
      %s26 = sphi 0, %s23
      %s27 = sphi 0, %s24
      %s43 = sphi 0, %s45
      %s46 = sphi 0, %s43
      %s47 = sphi 0, %s46
      %s63 = sphi 0, %s47
      %s69 = sphi 0, %s71
      %s72 = sphi 0, %s69
      %s73 = sphi 0, %s72
      %s89 = sphi 0, %s73
      %s95 = sphi 0, %s97
      %s98 = sphi 0, %s95
      %s99 = sphi 0, %s98
      %s115 = sphi 0, %s99
      %s125 = sphi 0, %s127
      %s128 = sphi 0, %s125
      %s129 = sphi 0, %s128
      %s145 = sphi 0, %s129
    $region4: #{_lambda_.9} parent=1 // loop_header_branch
      %15 = sbr.rel (%p13) target = $region8
    $region5: #{_lambda_.9} parent=1 // loop_body
      %s17 = ssub.s32 %s12, 1
      %s18 = ssub.s32 %s12, 2
      %s28 = sadd.s32 1, %s21
      %p29 = scmp.ge.s32.totalorder %s28, 1
      %s30 = scalar_select %p29, 0, %s28
      %s31 = sadd.s32 1, %s20
      %s32 = scalar_select %p29, %s31, %s20
      %p33 = scmp.ge.s32.totalorder %s32, 1
      %s34 = scalar_select %p33, 0, %s32
      %s35 = sadd.s32 1, %s19
      %s36 = scalar_select %p33, %s35, %s19
      %p37 = scmp.ge.s32.totalorder %s36, 2
      %s38 = scalar_select %p37, 0, %s36
      %s39 = ssub.s32 %s19, %s38
      %s40 = ssub.s32 %s20, %s34
      %s41 = sor.u32 %s39, %s40
      %p42 = scmp.eq.s32.totalorder %s41, 0
      %s44 = sadd.s32 %s43, 1
      %s45 = scalar_select %p42, %s43, %s44
      %p48 = pneg %p42
      %p49 = scmp.eq.s32.totalorder %s12, 1
      %p50 = por %p48, %p49
      %p51 = scmp.ne.s32.totalorder %s43, %s46
      %p52 = scmp.eq.s32.totalorder %s12, 0
      %p53 = por %p51, %p52
      %p54 = scmp.ne.s32.totalorder %s43, %s46
      %p55 = scmp.eq.s32.totalorder %s17, 1
      %p56 = por %p54, %p55
      %p57 = scmp.ne.s32.totalorder %s46, %s47
      %p58 = scmp.eq.s32.totalorder %s17, 0
      %p59 = por %p57, %p58
      %p60 = scmp.ne.s32.totalorder %s46, %s47
      %p61 = scmp.eq.s32.totalorder %s18, 1
      %p62 = por %p60, %p61
      %p64 = scmp.ne.s32.totalorder %s47, %s63
      %p65 = scmp.eq.s32.totalorder %s18, 0
      %p66 = por %p64, %p65
      %s67 = ssub.s32 %s21, %s30
      %p68 = scmp.eq.s32.totalorder %s67, 0
      %s70 = sadd.s32 %s69, 1
      %s71 = scalar_select %p68, %s69, %s70
      %p74 = pneg %p68
      %p75 = scmp.eq.s32.totalorder %s12, 1
      %p76 = por %p74, %p75
      %p77 = scmp.ne.s32.totalorder %s69, %s72
      %p78 = scmp.eq.s32.totalorder %s12, 0
      %p79 = por %p77, %p78
      %p80 = scmp.ne.s32.totalorder %s69, %s72
      %p81 = scmp.eq.s32.totalorder %s17, 1
      %p82 = por %p80, %p81
      %p83 = scmp.ne.s32.totalorder %s72, %s73
      %p84 = scmp.eq.s32.totalorder %s17, 0
      %p85 = por %p83, %p84
      %p86 = scmp.ne.s32.totalorder %s72, %s73
      %p87 = scmp.eq.s32.totalorder %s18, 1
      %p88 = por %p86, %p87
      %p90 = scmp.ne.s32.totalorder %s73, %s89
      %p91 = scmp.eq.s32.totalorder %s18, 0
      %p92 = por %p90, %p91
      %s93 = ssub.s32 %s21, %s30
      %p94 = scmp.eq.s32.totalorder %s93, 0
      %s96 = sadd.s32 %s95, 1
      %s97 = scalar_select %p94, %s95, %s96
      %p100 = pneg %p94
      %p101 = scmp.eq.s32.totalorder %s12, 1
      %p102 = por %p100, %p101
      %p103 = scmp.ne.s32.totalorder %s95, %s98
      %p104 = scmp.eq.s32.totalorder %s12, 0
      %p105 = por %p103, %p104
      %p106 = scmp.ne.s32.totalorder %s95, %s98
      %p107 = scmp.eq.s32.totalorder %s17, 1
      %p108 = por %p106, %p107
      %p109 = scmp.ne.s32.totalorder %s98, %s99
      %p110 = scmp.eq.s32.totalorder %s17, 0
      %p111 = por %p109, %p110
      %p112 = scmp.ne.s32.totalorder %s98, %s99
      %p113 = scmp.eq.s32.totalorder %s18, 1
      %p114 = por %p112, %p113
      %p116 = scmp.ne.s32.totalorder %s99, %s115
      %p117 = scmp.eq.s32.totalorder %s18, 0
      %p118 = por %p116, %p117
      %s119 = ssub.s32 %s19, %s38
      %s120 = ssub.s32 %s20, %s34
      %s121 = sor.u32 %s119, %s120
      %s122 = ssub.s32 %s21, %s30
      %s123 = sor.u32 %s121, %s122
      %p124 = scmp.eq.s32.totalorder %s123, 0
      %s126 = sadd.s32 %s125, 1
      %s127 = scalar_select %p124, %s125, %s126
      %p130 = pneg %p124
      %p131 = scmp.eq.s32.totalorder %s12, 1
      %p132 = por %p130, %p131
      %p133 = scmp.ne.s32.totalorder %s125, %s128
      %p134 = scmp.eq.s32.totalorder %s12, 0
      %p135 = por %p133, %p134
      %p136 = scmp.ne.s32.totalorder %s125, %s128
      %p137 = scmp.eq.s32.totalorder %s17, 1
      %p138 = por %p136, %p137
      %p139 = scmp.ne.s32.totalorder %s128, %s129
      %p140 = scmp.eq.s32.totalorder %s17, 0
      %p141 = por %p139, %p140
      %p142 = scmp.ne.s32.totalorder %s128, %s129
      %p143 = scmp.eq.s32.totalorder %s18, 1
      %p144 = por %p142, %p143
      %p146 = scmp.ne.s32.totalorder %s129, %s145
      %p147 = scmp.eq.s32.totalorder %s18, 0
      %p148 = por %p146, %p147
      %p149 = scmp.le.s32.totalorder 1, %s12
      %p150 = scmp.lt.s32.totalorder %s12, 3
      %p151 = pnand %p149, %p150
      %p152 = pneg %p151
      // Predicated region
      $region9: #{_lambda_.9} parent=5 // pred_check
        _
      $region10: #{_lambda_.9} parent=5 // pred_check_branch
        %154 = sbr.rel (%p151) target = $region12
      $region11: #{_lambda_.9} parent=5 // pred_region
        %s155 = ssub.s32 %s12, 1
        // Predicated region
        $region13: #{_lambda_.9} parent=11 // pred_check
          %p156 = pneg %p85
        $region14: #{_lambda_.9} parent=11 // pred_check_branch
          %158 = sbr.rel (%p156) target = $region16
        $region15: #{_lambda_.9} parent=11 // pred_region
          %p159 = scmp.lt.s32.totalorder %s24, 0
          %s160 = scalar_select %p159, %s24, 0
          %s161 = smul.addr %s160, 8
          %s162 = scalar_lea.vmem %s1, %s161
        $region16: #{_lambda_.9} parent=11 // pred_fallthru
          _
        // Predicated region
        $region17: #{_lambda_.9} parent=11 // pred_check
          %p163 = pneg %p111
        $region18: #{_lambda_.9} parent=11 // pred_check_branch
          %165 = sbr.rel (%p163) target = $region20
        $region19: #{_lambda_.9} parent=11 // pred_region
          %p166 = scmp.lt.s32.totalorder %s24, 0
          %s167 = scalar_select %p166, %s24, 0
          %s168 = scalar_lea.vmem %s2, %s167
        $region20: #{_lambda_.9} parent=11 // pred_fallthru
          _
      $region12: #{_lambda_.9} parent=5 // pred_fallthru
        _
      %p169 = scmp.lt.s32.totalorder %s12, 2
      // Predicated region
      $region21: #{_lambda_.9} parent=5 // pred_check
        %p170 = pneg %p169
      $region22: #{_lambda_.9} parent=5 // pred_check_branch
        %172 = sbr.rel (%p170) target = $region24
      $region23: #{_lambda_.9} parent=5 // pred_region
        // Predicated region
        $region25: #{_lambda_.9} parent=23 // pred_check
          %p173 = pneg %p53
        $region26: #{_lambda_.9} parent=23 // pred_check_branch
          %175 = sbr.rel (%p173) target = $region28
        $region27: #{_lambda_.9} parent=23 // pred_region
          %p176 = scmp.lt.s32.totalorder %s19, 1
          %s177 = scalar_select %p176, %s19, 1
          %p178 = scmp.lt.s32.totalorder %s20, 0
          %s179 = scalar_select %p178, %s20, 0
          %s180 = smul.addr %s177, 4
          %s181 = sadd.s32 %s179, %s180
          %s182 = smul.addr %s181, 8
          %s183 = scalar_lea.vmem %s0, %s182
        $region28: #{_lambda_.9} parent=23 // pred_fallthru
          _
      $region24: #{_lambda_.9} parent=5 // pred_fallthru
        _
      %p184 = scmp.le.s32.totalorder 1, %s12
      %p185 = scmp.lt.s32.totalorder %s12, 3
      %p186 = pnand %p184, %p185
      %p187 = pneg %p186
      // Predicated region
      $region29: #{_lambda_.9} parent=5 // pred_check
        _
      $region30: #{_lambda_.9} parent=5 // pred_check_branch
        %189 = sbr.rel (%p186) target = $region32
      $region31: #{_lambda_.9} parent=5 // pred_region
        %s190 = ssub.s32 %s12, 1
        %p191 = scmp.lt.s32.totalorder %s22, 1
        %s192 = scalar_select %p191, %s22, 1
        %p193 = scmp.lt.s32.totalorder %s23, 0
        %s194 = scalar_select %p193, %s23, 0
        %s195 = smul.addr %s192, 4
        %s196 = sadd.s32 %s194, %s195
        %s197 = smul.addr %s196, 8
        %s198 = scalar_lea.vmem %s0, %s197
        %p199 = pneg %p59
        %p200 = pneg %p56
        %p201 = scmp.lt.s32.totalorder %s24, 0
        %s202 = scalar_select %p201, %s24, 0
        %s203 = smul.addr %s202, 8
        %s204 = scalar_lea.vmem %s1, %s203
        %p205 = pneg %p85
        %p206 = pneg %p82
        %p207 = scmp.lt.s32.totalorder %s24, 0
        %s208 = scalar_select %p207, %s24, 0
        %s209 = scalar_lea.vmem %s2, %s208
        %p210 = pneg %p111
        %p211 = pneg %p108
        %p212 = pneg %p141
        %p213 = pneg %p138
        %s214 = sand.u32 %s128, 1
        %s215 = scalar_lea.sflag [#allocation3], %s214
        %s216 = sand.u32 %s128, 1
        %s217 = smul.addr %s216, 8
        %s218 = scalar_lea.vmem [#allocation2], %s217
        %p219 = scmp.lt.s32.totalorder %s22, 1
        %s220 = scalar_select %p219, %s22, 1
        %p221 = scmp.lt.s32.totalorder %s23, 0
        %s222 = scalar_select %p221, %s23, 0
        %s223 = smul.addr %s220, 4
        %s224 = sadd.s32 %s222, %s223
        %s225 = smul.addr %s224, 8
        %s226 = scalar_lea.vmem %s0, %s225
        %p227 = scmp.lt.s32.totalorder %s24, 0
        %s228 = scalar_select %p227, %s24, 0
        %s229 = smul.addr %s228, 8
        %s230 = scalar_lea.vmem %s1, %s229
        %p231 = scmp.lt.s32.totalorder %s24, 0
        %s232 = scalar_select %p231, %s24, 0
        %s233 = scalar_lea.vmem %s2, %s232
        %v234 = vld [vmem:[%s226] sm:$0xff]
        %s235 = scalar_lea.vmem %s226, 8
        %v236 = vld [vmem:[%s235] sm:$0xff]
        %s237 = scalar_lea.vmem %s226, 16
        %v238 = vld [vmem:[%s237] sm:$0xff]
        %s239 = scalar_lea.vmem %s226, 24
        %v240 = vld [vmem:[%s239] sm:$0xff]
        %242 = vrot.lane.b32.xlu0 %v236, 16
        %v243 = vpop.permute.xlu0 %242
        %246 = vrot.lane.b32.xlu0 %v238, 32
        %v247 = vpop.permute.xlu0 %246
        %250 = vrot.lane.b32.xlu0 %v240, 48
        %v251 = vpop.permute.xlu0 %250
        %vm253 = vcmask 130048
        %v254 = vsel %vm253, %v234, %v243
        %vm255 = vcmask 261120
        %v256 = vsel %vm255, %v254, %v247
        %vm257 = vcmask 392192
        %v258 = vsel %vm257, %v256, %v251
        %v259 = vld [vmem:[%s230] sm:$0xff]
        %v260 = vld [vmem:[%s230 + $0x8] sm:$0xff]
        %v261 = vld [vmem:[%s230 + $0x10] sm:$0xff]
        %v262 = vld [vmem:[%s230 + $0x18] sm:$0xff]
        %v263 = vld [vmem:[%s230 + $0x20] sm:$0xff]
        %v264 = vld [vmem:[%s230 + $0x28] sm:$0xff]
        %v265 = vld [vmem:[%s230 + $0x30] sm:$0xff]
        %v266 = vld [vmem:[%s230 + $0x38] sm:$0xff]
        %v267 = vld [vmem:[%s233] sm:$0x1]
        %v269 = vlaneseq
        %v270 = vshrl.u32 %v269, 7
        %v271 = vsub.s32 0, %v270
        %v272 = vrot.slane %v267, %v271
        %vm274 = vcmask 523264
        %v276 = vsel %vm274, %v258, 0
        %278 = vmatprep.subr.mxu0 0.0
        %279 = vmatpush1.msra.mxu0 %v259
        %280 = vmatprep.subr.mxu0 0.0
        %281 = vmatpush1.msra.mxu0 %v260
        %282 = vmatprep.subr.mxu0 0.0
        %283 = vmatpush1.msra.mxu0 %v261
        %284 = vmatprep.subr.mxu0 0.0
        %285 = vmatpush1.msra.mxu0 %v262
        %286 = vmatprep.subr.mxu0 0.0
        %287 = vmatpush1.msra.mxu0 %v263
        %288 = vmatprep.subr.mxu0 0.0
        %289 = vmatpush1.msra.mxu0 %v264
        %290 = vmatprep.subr.mxu0 0.0
        %291 = vmatpush1.msra.mxu0 %v265
        %292 = vmatprep.subr.mxu0 0.0
        %293 = vmatpush1.msra.mxu0 %v266
        %294 = vmatprep.subr.mxu0 0.0
        %295 = vmatpush1.msra.mxu0 0.0
        %296 = vmatprep.subr.mxu0 0.0
        %297 = vmatpush1.msra.mxu0 0.0
        %298 = vmatprep.subr.mxu0 0.0
        %299 = vmatpush1.msra.mxu0 0.0
        %300 = vmatprep.subr.mxu0 0.0
        %301 = vmatpush1.msra.mxu0 0.0
        %302 = vmatprep.subr.mxu0 0.0
        %303 = vmatpush1.msra.mxu0 0.0
        %304 = vmatprep.subr.mxu0 0.0
        %305 = vmatpush1.msra.mxu0 0.0
        %306 = vmatprep.subr.mxu0 0.0
        %307 = vmatpush1.msra.mxu0 0.0
        %308 = vmatprep.subr.mxu0 0.0
        %309 = vmatpush1.msra.mxu0 0.0
        %310 = vmatprep.subr.mxu0 0.0
        %311 = vmatpush1.msra.mxu0 0.0
        %312 = vmatprep.subr.mxu0 0.0
        %313 = vmatpush1.msra.mxu0 0.0
        %314 = vmatprep.subr.mxu0 0.0
        %315 = vmatpush1.msra.mxu0 0.0
        %316 = vmatprep.subr.mxu0 0.0
        %317 = vmatpush1.msra.mxu0 0.0
        %318 = vmatprep.subr.mxu0 0.0
        %319 = vmatpush1.msra.mxu0 0.0
        %320 = vmatprep.subr.mxu0 0.0
        %321 = vmatpush1.msra.mxu0 0.0
        %322 = vmatprep.subr.mxu0 0.0
        %323 = vmatpush1.msra.mxu0 0.0
        %324 = vmatprep.subr.mxu0 0.0
        %325 = vmatpush1.msra.mxu0 0.0
        %326 = vmatprep.subr.mxu0 0.0
        %327 = vmatpush1.msra.mxu0 0.0
        %328 = vmatprep.subr.mxu0 0.0
        %329 = vmatpush1.msra.mxu0 0.0
        %330 = vmatprep.subr.mxu0 0.0
        %331 = vmatpush1.msra.mxu0 0.0
        %332 = vmatprep.subr.mxu0 0.0
        %333 = vmatpush1.msra.mxu0 0.0
        %334 = vmatprep.subr.mxu0 0.0
        %335 = vmatpush1.msra.mxu0 0.0
        %336 = vmatprep.subr.mxu0 0.0
        %337 = vmatpush1.msra.mxu0 0.0
        %338 = vmatprep.subr.mxu0 0.0
        %339 = vmatpush1.msra.mxu0 0.0
        %340 = vmatprep.subr.mxu0 0.0
        %341 = vmatpush1.msra.mxu0 0.0
        %342 = vmatprep.mubr.f32.mxu0 0.0
        %343 = vmatmul.mubr.f32.gmra.mrb[0].mxu0 %v276
        %v344 = vpop.f32.mrb[0].mxu0
        %v345 = vadd.f32 %v272, %v344
        %v346 = vpop.f32.mrb[0].mxu0
        %347 = vdwg.mxu0
        %348 = vst.msk [vmem:[%s218] sm:$0xff] %vm255, %v345
        %s349 = sand.u32 %s128, 1
        %s350 = scalar_lea.sflag [#allocation3], %s349
        %s351 = sand.u32 %s128, 1
        %s352 = smul.addr %s351, 8
        %s353 = scalar_lea.vmem [#allocation2], %s352
        // Predicated region
        $region33: #{_lambda_.9} parent=31 // pred_check
          %p354 = pneg %p138
        $region34: #{_lambda_.9} parent=31 // pred_check_branch
          %356 = sbr.rel (%p354) target = $region36
        $region35: #{_lambda_.9} parent=31 // pred_region
          %s358 = ssub.s32 128, 128
          %359 = vsyncadd %s350, %s358
          %s360 = sadd.s32 %s24, %s23
          %s361 = sadd.s32 %s360, %s22
          %s362 = smul.addr %s361, 128
          %s363 = scalar_lea.hbm %s3, %s362
          %s365 = sshll.u32 %s353, 4
          %s366 = int_to_ptr.vmem [resolvable:$true] %s365
          %368 = dma.vmem_to_hbm [thread:$0]  %s366, 128, %s363, %s350
        $region36: #{_lambda_.9} parent=31 // pred_fallthru
          _
      $region32: #{_lambda_.9} parent=5 // pred_fallthru
        _
      %p369 = scmp.le.s32.totalorder 2, %s12
      // Predicated region
      $region37: #{_lambda_.9} parent=5 // pred_check
        %p370 = pneg %p369
      $region38: #{_lambda_.9} parent=5 // pred_check_branch
        %372 = sbr.rel (%p370) target = $region40
      $region39: #{_lambda_.9} parent=5 // pred_region
        %s373 = ssub.s32 %s12, 2
        // Predicated region
        $region41: #{_lambda_.9} parent=39 // pred_check
          %p374 = pneg %p144
        $region42: #{_lambda_.9} parent=39 // pred_check_branch
          %376 = sbr.rel (%p374) target = $region44
        $region43: #{_lambda_.9} parent=39 // pred_region
          %s377 = sand.u32 %s129, 1
          %s378 = scalar_lea.sflag [#allocation3], %s377
          %s379 = sand.u32 %s129, 1
          %s380 = smul.addr %s379, 8
          %s381 = scalar_lea.vmem [#allocation2], %s380
          %382 = dma.done %s378, 128
        $region44: #{_lambda_.9} parent=39 // pred_fallthru
          _
      $region40: #{_lambda_.9} parent=5 // pred_fallthru
        _
    $region6: #{_lambda_.9} parent=1 // loop_footer
      %s16 = sadd.s32 1, %s12
    $region7: #{_lambda_.9} parent=1 // loop_footer_branch
      %11 = sbr.rel target = $region3
    $region8: #{_lambda_.9} parent=1 // loop_exit
      _
    %383 = vsyncpa [#allocation3], 1
    %s384 = scalar_lea.sflag [#allocation3], 1
    %385 = vsyncpa %s384, 1

</llo_original>
